<compile_context>
chip_gen: v7x
topology: tpu7x:2x2x1
jax: 0.10.0
libtpu: 0.0.40
codegen_flags: <defaults>
</compile_context>

<pallas_src>
import functools

import jax
import jax.numpy as jnp
from jax.experimental import pallas as pl
from jax.experimental.pallas import tpu as pltpu


# ----------------------------------------------------------------------------- kernel
def _mha_fused_kernel(*refs, B, L, heads, dh, cross):
    """Whole MultiHeadAtt.forward in a single program.

    Sequence inputs arrive flattened to (N, C) with N = B*L.  Weights arrive packed:
      wq  : (Cq, heads*dh)   bf16, attention scale folded in
      wkv : (Ckv, 2*heads*dh) bf16, [to_k | to_v] concatenated along lanes
      wo  : (heads*dh, Cq)   bf16
      bias: (1, 3*heads*dh + Cq) f32 = [bq*scale | bk | bv | bo]
      (cross only) wf : (Ckv, Ckv) bf16, bn : (3, Ckv) f32 = [conv bias; gamma; beta]
    """
    if cross:
        x1_ref, x2_ref, wq_ref, wkv_ref, wf_ref, wo_ref, bias_ref, bn_ref, o_ref = refs
    else:
        x1_ref, x2_ref, x3_ref, wq_ref, wkv_ref, wo_ref, bias_ref, o_ref = refs

    N = B * L
    HD = heads * dh

    x1 = x1_ref[...]                                       # (N, Cq) f32
    bias = bias_ref[...]                                   # (1, 3*HD + Cq) f32
    bq = bias[:, 0 * HD:1 * HD]
    bk = bias[:, 1 * HD:2 * HD]
    bv = bias[:, 2 * HD:3 * HD]
    bo = bias[:, 3 * HD:]

    # ---- Q projection (one wide bf16 matmul; scale already folded into wq & bq) ----
    q = jnp.dot(x1.astype(jnp.bfloat16), wq_ref[...],
                preferred_element_type=jnp.float32) + bq   # (N, HD) f32

    # ---- K/V source + projection ----
    if cross:
        # x2_feat = fuse_conv(x1_feat * (x2_feat - x1_feat)); x3_feat = x2_feat
        # 1x1 conv == per-position matmul; BatchNorm2d (training mode) uses biased batch
        # statistics over all (batch, H, W) rows, eps = 1e-5.  One-pass stats.
        x2 = x2_ref[...]
        bn = bn_ref[...]                                   # (3, Ckv) f32
        a = (x1 * (x2 - x1)).astype(jnp.bfloat16)
        y = jnp.dot(a, wf_ref[...], preferred_element_type=jnp.float32) + bn[0:1, :]
        mean = jnp.mean(y, axis=0, keepdims=True)
        var = jnp.mean(y * y, axis=0, keepdims=True) - mean * mean
        yn = (y - mean) * jax.lax.rsqrt(var + 1e-5) * bn[1:2, :] + bn[2:3, :]
        kv_src = jnp.maximum(yn, 0.0).astype(jnp.bfloat16)  # ReLU, (N, Ckv)

        # K and V share the source -> ONE (N, Ckv) @ (Ckv, 2*HD) matmul.
        kv = jnp.dot(kv_src, wkv_ref[...], preferred_element_type=jnp.float32)
        k = kv[:, :HD] + bk
        v = kv[:, HD:] + bv
    else:
        wkv = wkv_ref[...]
        k = jnp.dot(x2_ref[...].astype(jnp.bfloat16), wkv[:, :HD],
                    preferred_element_type=jnp.float32) + bk
        v = jnp.dot(x3_ref[...].astype(jnp.bfloat16), wkv[:, HD:],
                    preferred_element_type=jnp.float32) + bv

    # ---- split heads onto the major axis (static lane slices, major-dim concat) ----
    def split_heads(t):                                    # (N, HD) -> (heads*B, L, dh) bf16
        t = t.astype(jnp.bfloat16)
        return jnp.concatenate(
            [t[:, h * dh:(h + 1) * dh].reshape(B, L, dh) for h in range(heads)], axis=0)

    qh, kh, vh = split_heads(q), split_heads(k), split_heads(v)

    # ---- attention core: one batched contraction + one softmax over all (head,batch) ----
    s = jnp.einsum('bqd,bkd->bqk', qh, kh,
                   preferred_element_type=jnp.float32)     # (heads*B, L, L) f32
    m = jnp.max(s, axis=-1, keepdims=True)
    e = jnp.exp(s - m)
    l = jnp.sum(e, axis=-1, keepdims=True)
    o_un = jnp.einsum('bqk,bkd->bqd', e.astype(jnp.bfloat16), vh,
                      preferred_element_type=jnp.float32)  # (heads*B, L, dh) f32
    # Deferred softmax normalization: scale the (L, dh) output, not the (L, L) probs.
    o = o_un * pl.reciprocal(l, approx=True)

    # ---- merge heads back onto lanes; single to_out matmul (K = heads*dh) ----
    o_cat = jnp.concatenate(
        [o[h * B:(h + 1) * B].reshape(N, dh) for h in range(heads)], axis=1)  # (N, HD)
    o_ref[...] = jnp.dot(o_cat.astype(jnp.bfloat16), wo_ref[...],
                         preferred_element_type=jnp.float32) + bo             # (N, Cq)


# ----------------------------------------------------------------------------- wrapper
def multi_head_att(packed, x1, x2, x3, *, heads, cross):
    """MultiHeadAtt.forward.  `cross` is the static equivalent of `not x1.equal(x2)`."""
    B, L, Cq = x1.shape
    Ckv = x2.shape[-1]
    HD = packed['wq'].shape[-1]
    assert HD % heads == 0
    dh = HD // heads
    N = B * L

    kernel = functools.partial(_mha_fused_kernel, B=B, L=L, heads=heads, dh=dh,
                               cross=bool(cross))
    vmem = pl.BlockSpec(memory_space=pltpu.MemorySpace.VMEM)

    if cross:
        # x3 is ignored on the cross path (x3_feat = x2_feat) -> do not DMA it.
        args = (x1.reshape(N, Cq), x2.reshape(N, Ckv),
                packed['wq'], packed['wkv'], packed['wf'], packed['wo'],
                packed['bias'], packed['bn'])
    else:
        args = (x1.reshape(N, Cq), x2.reshape(N, Ckv), x3.reshape(N, Ckv),
                packed['wq'], packed['wkv'], packed['wo'], packed['bias'])

    out = pl.pallas_call(
        kernel,
        out_shape=jax.ShapeDtypeStruct((N, Cq), jnp.float32),
        in_specs=[vmem] * len(args),
        out_specs=vmem,
    )(*args)

    return out.reshape(B, L, Cq)


# ----------------------------------------------------------------------------- params
def init_raw_params(key, dim_q, dim_kv, attention_dim, heads):
    """Random params in torch layout (transposed to right-multiply convention).

    Mapping from torch:
      to_q.weight (A, Cq)          -> wq = weight.T                      (Cq, A)
      to_q.bias   (A,)             -> bq = bias[None, :]                 (1, A)
      to_out[0].weight (Cq, A)     -> wo = weight.T                      (A, Cq)
      fuse_conv[0].weight (C,C,1,1)-> wf[ci, co] = weight[co, ci]        (C, C)
      fuse_conv[1] (BatchNorm2d)   -> bng = gamma, bnb = beta            (1, C)
    """
    assert attention_dim % heads == 0, "attention_dim must be divisible by heads"
    A = attention_dim
    ks = jax.random.split(key, 10)

    def nrm(k, shape, s=0.1):
        return s * jax.random.normal(k, shape, jnp.float32)

    return dict(
        wf=nrm(ks[0], (dim_kv, dim_kv)), bf=nrm(ks[1], (1, dim_kv)),
        bng=jnp.ones((1, dim_kv), jnp.float32), bnb=jnp.zeros((1, dim_kv), jnp.float32),
        wq=nrm(ks[2], (dim_q, A)), bq=nrm(ks[3], (1, A)),
        wk=nrm(ks[4], (dim_kv, A)), bk=nrm(ks[5], (1, A)),
        wv=nrm(ks[6], (dim_kv, A)), bv=nrm(ks[7], (1, A)),
        wo=nrm(ks[8], (A, dim_q)), bo=nrm(ks[9], (1, dim_q)),
    )


def pack_params(raw, *, heads):
    """Host-side constant folding + packing (fewer DMAs, bf16 MXU operands)."""
    HD = raw['wq'].shape[-1]
    dh = HD // heads
    scale = float(dh) ** -0.5      # (attention_dim // heads)^-0.5, folded into the Q projection
    return dict(
        wq=(raw['wq'] * scale).astype(jnp.bfloat16),                                    # (Cq, HD)
        wkv=jnp.concatenate([raw['wk'], raw['wv']], axis=1).astype(jnp.bfloat16),       # (Ckv, 2*HD)
        wo=raw['wo'].astype(jnp.bfloat16),                                              # (HD, Cq)
        bias=jnp.concatenate([raw['bq'] * scale, raw['bk'], raw['bv'], raw['bo']],
                             axis=1).astype(jnp.float32),                               # (1, 3*HD+Cq)
        wf=raw['wf'].astype(jnp.bfloat16),                                              # (Ckv, Ckv)
        bn=jnp.concatenate([raw['bf'], raw['bng'], raw['bnb']],
                           axis=0).astype(jnp.float32),                                 # (3, Ckv)
    )


# ----------------------------------------------------------------------------- main
if __name__ == "__main__":
    B = 2
    h = w = 8
    L = h * w                      # 64 (L must be a perfect square in the torch module)
    dim_q = dim_kv = 8             # torch code requires dim_q == dim_kv for the cross path
    heads = 2
    attention_dim = 16

    key = jax.random.PRNGKey(0)
    k0, k1, k2, kp = jax.random.split(key, 4)
    x1 = jax.random.normal(k0, (B, L, dim_q), jnp.float32)
    x2 = jax.random.normal(k1, (B, L, dim_kv), jnp.float32)
    x3 = jax.random.normal(k2, (B, L, dim_kv), jnp.float32)

    raw = init_raw_params(kp, dim_q, dim_kv, attention_dim, heads)
    packed = pack_params(raw, heads=heads)

    # Static equivalent of `cross = not x1.equal(x2)` -- evaluated once on concrete
    # inputs, then passed as a static flag so the whole forward can be jitted.
    cross = not bool(jnp.array_equal(x1, x2))

    fwd = jax.jit(multi_head_att, static_argnames=("heads", "cross"))

    # cross path (x1 != x2): fuse_conv + BN + ReLU feeds K/V.
    out = jax.block_until_ready(fwd(packed, x1, x2, x3, heads=heads, cross=cross))
    assert out.shape == (B, L, dim_q)
    assert bool(jnp.all(jnp.isfinite(out)))

    # self-attention path (x1 == x2): plain Q/K/V projections from the three inputs.
    out_self = jax.block_until_ready(fwd(packed, x1, x1, x1, heads=heads, cross=False))
    assert out_self.shape == (B, L, dim_q)
    assert bool(jnp.all(jnp.isfinite(out_self)))

    print("KERNEL_OK")
</pallas_src>

<mosaic_0001>
module attributes {stable_mosaic.version = 11 : i64} {
  func.func @_mha_fused_kernel(%arg0: memref<128x8xf32, #tpu.memory_space<vmem>>, %arg1: memref<128x8xf32, #tpu.memory_space<vmem>>, %arg2: memref<8x16xbf16, #tpu.memory_space<vmem>>, %arg3: memref<8x32xbf16, #tpu.memory_space<vmem>>, %arg4: memref<8x8xbf16, #tpu.memory_space<vmem>>, %arg5: memref<16x8xbf16, #tpu.memory_space<vmem>>, %arg6: memref<1x56xf32, #tpu.memory_space<vmem>>, %arg7: memref<3x8xf32, #tpu.memory_space<vmem>>, %arg8: memref<128x8xf32, #tpu.memory_space<vmem>>) attributes {dimension_semantics = [], scalar_prefetch = 0 : i64, scratch_operands = 0 : i64, tpu.core_type = #tpu.core_type<tc>} {
    %c0 = arith.constant 0 : index
    %c0_0 = arith.constant 0 : index
    %0 = vector.load %arg0[%c0, %c0_0] : memref<128x8xf32, #tpu.memory_space<vmem>>, vector<128x8xf32>
    %c0_1 = arith.constant 0 : index
    %c0_2 = arith.constant 0 : index
    %1 = vector.load %arg6[%c0_1, %c0_2] : memref<1x56xf32, #tpu.memory_space<vmem>>, vector<1x56xf32>
    %2 = vector.extract_strided_slice %1 {offsets = [0, 0], sizes = [1, 16], strides = [1, 1]} : vector<1x56xf32> to vector<1x16xf32>
    %3 = vector.extract_strided_slice %1 {offsets = [0, 16], sizes = [1, 16], strides = [1, 1]} : vector<1x56xf32> to vector<1x16xf32>
    %4 = vector.extract_strided_slice %1 {offsets = [0, 32], sizes = [1, 16], strides = [1, 1]} : vector<1x56xf32> to vector<1x16xf32>
    %5 = vector.extract_strided_slice %1 {offsets = [0, 48], sizes = [1, 8], strides = [1, 1]} : vector<1x56xf32> to vector<1x8xf32>
    %6 = arith.truncf %0 : vector<128x8xf32> to vector<128x8xbf16>
    %c0_3 = arith.constant 0 : index
    %c0_4 = arith.constant 0 : index
    %7 = vector.load %arg2[%c0_3, %c0_4] : memref<8x16xbf16, #tpu.memory_space<vmem>>, vector<8x16xbf16>
    %cst = arith.constant dense<0.000000e+00> : vector<128x16xf32>
    %8 = tpu.matmul %6, %7, %cst {dimension_numbers = #tpu.dot_dimension_numbers<[1], [0], [0], [1], [0, 0, 1, 1], [], []>} : vector<128x8xbf16>, vector<8x16xbf16>, vector<128x16xf32> -> vector<128x16xf32>
    %9 = vector.broadcast %2 : vector<1x16xf32> to vector<128x16xf32>
    %10 = arith.addf %8, %9 : vector<128x16xf32>
    %c0_5 = arith.constant 0 : index
    %c0_6 = arith.constant 0 : index
    %11 = vector.load %arg1[%c0_5, %c0_6] : memref<128x8xf32, #tpu.memory_space<vmem>>, vector<128x8xf32>
    %c0_7 = arith.constant 0 : index
    %c0_8 = arith.constant 0 : index
    %12 = vector.load %arg7[%c0_7, %c0_8] : memref<3x8xf32, #tpu.memory_space<vmem>>, vector<3x8xf32>
    %13 = arith.subf %11, %0 : vector<128x8xf32>
    %14 = arith.mulf %0, %13 : vector<128x8xf32>
    %15 = arith.truncf %14 : vector<128x8xf32> to vector<128x8xbf16>
    %c0_9 = arith.constant 0 : index
    %c0_10 = arith.constant 0 : index
    %16 = vector.load %arg4[%c0_9, %c0_10] : memref<8x8xbf16, #tpu.memory_space<vmem>>, vector<8x8xbf16>
    %cst_11 = arith.constant dense<0.000000e+00> : vector<128x8xf32>
    %17 = tpu.matmul %15, %16, %cst_11 {dimension_numbers = #tpu.dot_dimension_numbers<[1], [0], [0], [1], [0, 0, 1, 1], [], []>} : vector<128x8xbf16>, vector<8x8xbf16>, vector<128x8xf32> -> vector<128x8xf32>
    %18 = vector.extract_strided_slice %12 {offsets = [0, 0], sizes = [1, 8], strides = [1, 1]} : vector<3x8xf32> to vector<1x8xf32>
    %19 = vector.broadcast %18 : vector<1x8xf32> to vector<128x8xf32>
    %20 = arith.addf %17, %19 : vector<128x8xf32>
    %cst_12 = arith.constant dense<0.000000e+00> : vector<8xf32>
    %21 = vector.multi_reduction <add>, %20, %cst_12 [0] : vector<128x8xf32> to vector<8xf32>
    %22 = vector.shape_cast %21 : vector<8xf32> to vector<1x8xf32>
    %cst_13 = arith.constant 1.280000e+02 : f32
    %23 = vector.broadcast %cst_13 : f32 to vector<1x8xf32>
    %24 = arith.divf %22, %23 : vector<1x8xf32>
    %25 = arith.mulf %20, %20 : vector<128x8xf32>
    %cst_14 = arith.constant dense<0.000000e+00> : vector<8xf32>
    %26 = vector.multi_reduction <add>, %25, %cst_14 [0] : vector<128x8xf32> to vector<8xf32>
    %27 = vector.shape_cast %26 : vector<8xf32> to vector<1x8xf32>
    %cst_15 = arith.constant 1.280000e+02 : f32
    %28 = vector.broadcast %cst_15 : f32 to vector<1x8xf32>
    %29 = arith.divf %27, %28 : vector<1x8xf32>
    %30 = arith.mulf %24, %24 : vector<1x8xf32>
    %31 = arith.subf %29, %30 : vector<1x8xf32>
    %32 = vector.broadcast %24 : vector<1x8xf32> to vector<128x8xf32>
    %33 = arith.subf %20, %32 : vector<128x8xf32>
    %cst_16 = arith.constant 9.99999974E-6 : f32
    %34 = vector.broadcast %cst_16 : f32 to vector<1x8xf32>
    %35 = arith.addf %31, %34 : vector<1x8xf32>
    %36 = math.rsqrt %35 : vector<1x8xf32>
    %37 = vector.broadcast %36 : vector<1x8xf32> to vector<128x8xf32>
    %38 = arith.mulf %33, %37 : vector<128x8xf32>
    %39 = vector.extract_strided_slice %12 {offsets = [1, 0], sizes = [1, 8], strides = [1, 1]} : vector<3x8xf32> to vector<1x8xf32>
    %40 = vector.broadcast %39 : vector<1x8xf32> to vector<128x8xf32>
    %41 = arith.mulf %38, %40 : vector<128x8xf32>
    %42 = vector.extract_strided_slice %12 {offsets = [2, 0], sizes = [1, 8], strides = [1, 1]} : vector<3x8xf32> to vector<1x8xf32>
    %43 = vector.broadcast %42 : vector<1x8xf32> to vector<128x8xf32>
    %44 = arith.addf %41, %43 : vector<128x8xf32>
    %cst_17 = arith.constant 0.000000e+00 : f32
    %45 = vector.broadcast %cst_17 : f32 to vector<128x8xf32>
    %46 = arith.maximumf %44, %45 : vector<128x8xf32>
    %47 = arith.truncf %46 : vector<128x8xf32> to vector<128x8xbf16>
    %c0_18 = arith.constant 0 : index
    %c0_19 = arith.constant 0 : index
    %48 = vector.load %arg3[%c0_18, %c0_19] : memref<8x32xbf16, #tpu.memory_space<vmem>>, vector<8x32xbf16>
    %cst_20 = arith.constant dense<0.000000e+00> : vector<128x32xf32>
    %49 = tpu.matmul %47, %48, %cst_20 {dimension_numbers = #tpu.dot_dimension_numbers<[1], [0], [0], [1], [0, 0, 1, 1], [], []>} : vector<128x8xbf16>, vector<8x32xbf16>, vector<128x32xf32> -> vector<128x32xf32>
    %50 = vector.extract_strided_slice %49 {offsets = [0, 0], sizes = [128, 16], strides = [1, 1]} : vector<128x32xf32> to vector<128x16xf32>
    %51 = vector.broadcast %3 : vector<1x16xf32> to vector<128x16xf32>
    %52 = arith.addf %50, %51 : vector<128x16xf32>
    %53 = vector.extract_strided_slice %49 {offsets = [0, 16], sizes = [128, 16], strides = [1, 1]} : vector<128x32xf32> to vector<128x16xf32>
    %54 = vector.broadcast %4 : vector<1x16xf32> to vector<128x16xf32>
    %55 = arith.addf %53, %54 : vector<128x16xf32>
    %56 = arith.truncf %10 : vector<128x16xf32> to vector<128x16xbf16>
    %57 = vector.extract_strided_slice %56 {offsets = [0, 0], sizes = [128, 8], strides = [1, 1]} : vector<128x16xbf16> to vector<128x8xbf16>
    %58 = vector.shape_cast %57 : vector<128x8xbf16> to vector<2x64x8xbf16>
    %59 = vector.extract_strided_slice %56 {offsets = [0, 8], sizes = [128, 8], strides = [1, 1]} : vector<128x16xbf16> to vector<128x8xbf16>
    %60 = vector.shape_cast %59 : vector<128x8xbf16> to vector<2x64x8xbf16>
    %61 = tpu.concatenate %58, %60 in 0 : vector<2x64x8xbf16>, vector<2x64x8xbf16> -> vector<4x64x8xbf16>
    %62 = arith.truncf %52 : vector<128x16xf32> to vector<128x16xbf16>
    %63 = vector.extract_strided_slice %62 {offsets = [0, 0], sizes = [128, 8], strides = [1, 1]} : vector<128x16xbf16> to vector<128x8xbf16>
    %64 = vector.shape_cast %63 : vector<128x8xbf16> to vector<2x64x8xbf16>
    %65 = vector.extract_strided_slice %62 {offsets = [0, 8], sizes = [128, 8], strides = [1, 1]} : vector<128x16xbf16> to vector<128x8xbf16>
    %66 = vector.shape_cast %65 : vector<128x8xbf16> to vector<2x64x8xbf16>
    %67 = tpu.concatenate %64, %66 in 0 : vector<2x64x8xbf16>, vector<2x64x8xbf16> -> vector<4x64x8xbf16>
    %68 = arith.truncf %55 : vector<128x16xf32> to vector<128x16xbf16>
    %69 = vector.extract_strided_slice %68 {offsets = [0, 0], sizes = [128, 8], strides = [1, 1]} : vector<128x16xbf16> to vector<128x8xbf16>
    %70 = vector.shape_cast %69 : vector<128x8xbf16> to vector<2x64x8xbf16>
    %71 = vector.extract_strided_slice %68 {offsets = [0, 8], sizes = [128, 8], strides = [1, 1]} : vector<128x16xbf16> to vector<128x8xbf16>
    %72 = vector.shape_cast %71 : vector<128x8xbf16> to vector<2x64x8xbf16>
    %73 = tpu.concatenate %70, %72 in 0 : vector<2x64x8xbf16>, vector<2x64x8xbf16> -> vector<4x64x8xbf16>
    "tpu.trace_start"() <{level = 10 : i32, message = "bqd,bkd->bqk"}> : () -> ()
    %cst_21 = arith.constant dense<0.000000e+00> : vector<4x64x64xf32>
    %74 = tpu.matmul %61, %67, %cst_21 {dimension_numbers = #tpu.dot_dimension_numbers<[2], [2], [1], [1], [0, 0, 0, 1, 1, 1], [0], [0]>} : vector<4x64x8xbf16>, vector<4x64x8xbf16>, vector<4x64x64xf32> -> vector<4x64x64xf32>
    "tpu.trace_stop"() : () -> ()
    %cst_22 = arith.constant dense<0xFF800000> : vector<4x64xf32>
    %75 = vector.multi_reduction <maximumf>, %74, %cst_22 [2] : vector<4x64x64xf32> to vector<4x64xf32>
    %76 = vector.shape_cast %75 : vector<4x64xf32> to vector<4x64x1xf32>
    %77 = vector.broadcast %76 : vector<4x64x1xf32> to vector<4x64x64xf32>
    %78 = arith.subf %74, %77 : vector<4x64x64xf32>
    %79 = math.exp %78 : vector<4x64x64xf32>
    %cst_23 = arith.constant dense<0.000000e+00> : vector<4x64xf32>
    %80 = vector.multi_reduction <add>, %79, %cst_23 [2] : vector<4x64x64xf32> to vector<4x64xf32>
    %81 = vector.shape_cast %80 : vector<4x64xf32> to vector<4x64x1xf32>
    %82 = arith.truncf %79 : vector<4x64x64xf32> to vector<4x64x64xbf16>
    "tpu.trace_start"() <{level = 10 : i32, message = "bqk,bkd->bqd"}> : () -> ()
    %cst_24 = arith.constant dense<0.000000e+00> : vector<4x64x8xf32>
    %83 = tpu.matmul %82, %73, %cst_24 {dimension_numbers = #tpu.dot_dimension_numbers<[2], [1], [1], [2], [0, 0, 0, 1, 1, 2], [0], [0]>} : vector<4x64x64xbf16>, vector<4x64x8xbf16>, vector<4x64x8xf32> -> vector<4x64x8xf32>
    "tpu.trace_stop"() : () -> ()
    %84 = tpu.reciprocal %81 {approx = true} : vector<4x64x1xf32> -> vector<4x64x1xf32>
    %85 = vector.broadcast %84 : vector<4x64x1xf32> to vector<4x64x8xf32>
    %86 = arith.mulf %83, %85 : vector<4x64x8xf32>
    %87 = vector.extract_strided_slice %86 {offsets = [0, 0, 0], sizes = [2, 64, 8], strides = [1, 1, 1]} : vector<4x64x8xf32> to vector<2x64x8xf32>
    %88 = vector.shape_cast %87 : vector<2x64x8xf32> to vector<128x8xf32>
    %89 = vector.extract_strided_slice %86 {offsets = [2, 0, 0], sizes = [2, 64, 8], strides = [1, 1, 1]} : vector<4x64x8xf32> to vector<2x64x8xf32>
    %90 = vector.shape_cast %89 : vector<2x64x8xf32> to vector<128x8xf32>
    %91 = tpu.concatenate %88, %90 in 1 : vector<128x8xf32>, vector<128x8xf32> -> vector<128x16xf32>
    %92 = arith.truncf %91 : vector<128x16xf32> to vector<128x16xbf16>
    %c0_25 = arith.constant 0 : index
    %c0_26 = arith.constant 0 : index
    %93 = vector.load %arg5[%c0_25, %c0_26] : memref<16x8xbf16, #tpu.memory_space<vmem>>, vector<16x8xbf16>
    %cst_27 = arith.constant dense<0.000000e+00> : vector<128x8xf32>
    %94 = tpu.matmul %92, %93, %cst_27 {dimension_numbers = #tpu.dot_dimension_numbers<[1], [0], [0], [1], [0, 0, 1, 1], [], []>} : vector<128x16xbf16>, vector<16x8xbf16>, vector<128x8xf32> -> vector<128x8xf32>
    %95 = vector.broadcast %5 : vector<1x8xf32> to vector<128x8xf32>
    %96 = arith.addf %94, %95 : vector<128x8xf32>
    %c0_28 = arith.constant 0 : index
    %c0_29 = arith.constant 0 : index
    %97 = vector.load %arg8[%c0_28, %c0_29] : memref<128x8xf32, #tpu.memory_space<vmem>>, vector<128x8xf32>
    tpu.vector_store %arg8[%c0_28, %c0_29], %96 {strides = array<i32>} : memref<128x8xf32, #tpu.memory_space<vmem>>, vector<128x8xf32>,
    return
  }
}

</mosaic_0001>

<llo_original>
// kernel: multi_head_att.1
$region0: #{multi_head_att.1}
  #allocation0 [shape = 'u32[]', space=smem, size = 0x4, offset = 0x4, fixed_abs, tag = 'smem constant byte address 0x4 - core index']
  #allocation1 [shape = 'u32[144,128]{1,0:T(1,128)}', space=vmem, size = 0x12000, scoped, tag = 'internal scratch']
  %s0 = inlined_call_operand.vmem [shape: f32[128,8], index: 0, kind: input, shape index: {}]
  %s1 = inlined_call_operand.vmem [shape: f32[128,8], index: 1, kind: input, shape index: {}]
  %s2 = inlined_call_operand.vmem [shape: bf16[8,16], index: 2, kind: input, shape index: {}]
  %s3 = inlined_call_operand.vmem [shape: bf16[8,32], index: 3, kind: input, shape index: {}]
  %s4 = inlined_call_operand.vmem [shape: bf16[8,8], index: 4, kind: input, shape index: {}]
  %s5 = inlined_call_operand.vmem [shape: bf16[16,8], index: 5, kind: input, shape index: {}]
  %s6 = inlined_call_operand.vmem [shape: f32[1,56], index: 6, kind: input, shape index: {}]
  %s7 = inlined_call_operand.vmem [shape: f32[3,8], index: 7, kind: input, shape index: {}]
  %s8 = inlined_call_operand.vmem [shape: f32[128,8], index: 8, kind: output, shape index: {}]
  %s9 = sld [smem:[#allocation0]]
  $region42: #{multi_head_att.1} parent=0
    _
  %s11 = ssub.s32 1, %s9
  %s12 = scalar_select 0, %s11, %s9
  // Predicated region
  $region2: #{multi_head_att.1} parent=0 // pred_check
    _
  $region3: #{multi_head_att.1} parent=0 // pred_check_branch
    %14 = sbr.rel (0) target = $region5
  $region4: #{multi_head_att.1} parent=0 // pred_region
    _
  $region5: #{multi_head_att.1} parent=0 // pred_fallthru
    _
  // Predicated region
  $region6: #{multi_head_att.1} parent=0 // pred_check
    _
  $region7: #{multi_head_att.1} parent=0 // pred_check_branch
    %16 = sbr.rel (0) target = $region9
  $region8: #{multi_head_att.1} parent=0 // pred_region
    _
  $region9: #{multi_head_att.1} parent=0 // pred_fallthru
    _
  // Predicated region
  $region10: #{multi_head_att.1} parent=0 // pred_check
    _
  $region11: #{multi_head_att.1} parent=0 // pred_check_branch
    %18 = sbr.rel (0) target = $region13
  $region12: #{multi_head_att.1} parent=0 // pred_region
    _
  $region13: #{multi_head_att.1} parent=0 // pred_fallthru
    _
  // Predicated region
  $region14: #{multi_head_att.1} parent=0 // pred_check
    _
  $region15: #{multi_head_att.1} parent=0 // pred_check_branch
    %20 = sbr.rel (0) target = $region17
  $region16: #{multi_head_att.1} parent=0 // pred_region
    _
  $region17: #{multi_head_att.1} parent=0 // pred_fallthru
    _
  // Predicated region
  $region18: #{multi_head_att.1} parent=0 // pred_check
    _
  $region19: #{multi_head_att.1} parent=0 // pred_check_branch
    %22 = sbr.rel (0) target = $region21
  $region20: #{multi_head_att.1} parent=0 // pred_region
    _
  $region21: #{multi_head_att.1} parent=0 // pred_fallthru
    _
  // Predicated region
  $region22: #{multi_head_att.1} parent=0 // pred_check
    _
  $region23: #{multi_head_att.1} parent=0 // pred_check_branch
    %24 = sbr.rel (0) target = $region25
  $region24: #{multi_head_att.1} parent=0 // pred_region
    _
  $region25: #{multi_head_att.1} parent=0 // pred_fallthru
    _
  // Predicated region
  $region26: #{multi_head_att.1} parent=0 // pred_check
    _
  $region27: #{multi_head_att.1} parent=0 // pred_check_branch
    %26 = sbr.rel (0) target = $region29
  $region28: #{multi_head_att.1} parent=0 // pred_region
    _
  $region29: #{multi_head_att.1} parent=0 // pred_fallthru
    _
  // Predicated region
  $region30: #{multi_head_att.1} parent=0 // pred_check
    _
  $region31: #{multi_head_att.1} parent=0 // pred_check_branch
    %28 = sbr.rel (0) target = $region33
  $region32: #{multi_head_att.1} parent=0 // pred_region
    _
  $region33: #{multi_head_att.1} parent=0 // pred_fallthru
    _
  %v30 = vld [vmem:[%s0] sm:$0xff]
  %v31 = vld [vmem:[%s0 + $0x8] sm:$0xff]
  %v32 = vld [vmem:[%s0 + $0x10] sm:$0xff]
  %v33 = vld [vmem:[%s0 + $0x18] sm:$0xff]
  %v34 = vld [vmem:[%s0 + $0x20] sm:$0xff]
  %v35 = vld [vmem:[%s0 + $0x28] sm:$0xff]
  %v36 = vld [vmem:[%s0 + $0x30] sm:$0xff]
  %v37 = vld [vmem:[%s0 + $0x38] sm:$0xff]
  %v38 = vld [vmem:[%s0 + $0x40] sm:$0xff]
  %v39 = vld [vmem:[%s0 + $0x48] sm:$0xff]
  %v40 = vld [vmem:[%s0 + $0x50] sm:$0xff]
  %v41 = vld [vmem:[%s0 + $0x58] sm:$0xff]
  %v42 = vld [vmem:[%s0 + $0x60] sm:$0xff]
  %v43 = vld [vmem:[%s0 + $0x68] sm:$0xff]
  %v44 = vld [vmem:[%s0 + $0x70] sm:$0xff]
  %v45 = vld [vmem:[%s0 + $0x78] sm:$0xff]
  %v46 = vld [vmem:[%s6] sm:$0x1]
  %v47 = vpack.c.bf16 %v31, %v30
  %v48 = vpack.c.bf16 %v33, %v32
  %v49 = vpack.c.bf16 %v35, %v34
  %v50 = vpack.c.bf16 %v37, %v36
  %v51 = vpack.c.bf16 %v39, %v38
  %v52 = vpack.c.bf16 %v41, %v40
  %v53 = vpack.c.bf16 %v43, %v42
  %v54 = vpack.c.bf16 %v45, %v44
  %v55 = vld [vmem:[%s2] sm:$0xf]
  %v57 = vlaneseq
  %v58 = vshrl.u32 %v57, 7
  %v59 = vsub.s32 0, %v58
  %v60 = vrot.slane %v46, %v59
  %vm62 = vcmask 64512
  %v64 = vsel %vm62, %v47, 0
  %v67 = vsel %vm62, %v48, 0
  %v70 = vsel %vm62, %v49, 0
  %v73 = vsel %vm62, %v50, 0
  %v76 = vsel %vm62, %v51, 0
  %v79 = vsel %vm62, %v52, 0
  %v82 = vsel %vm62, %v53, 0
  %v85 = vsel %vm62, %v54, 0
  %vm87 = vcmask 1043456
  %v89 = vsel %vm87, %v55, 0
  %91 = vmatprep.subr.bf16.mxu0 0
  %92 = vmatpush1.bf16.msra.mxu0 %v89
  %93 = vmatprep.subr.bf16.mxu0 0
  %94 = vmatpush1.bf16.msra.mxu0 0
  %95 = vmatprep.subr.bf16.mxu0 0
  %96 = vmatpush1.bf16.msra.mxu0 0
  %97 = vmatprep.subr.bf16.mxu0 0
  %98 = vmatpush1.bf16.msra.mxu0 0
  %99 = vmatprep.subr.bf16.mxu0 0
  %100 = vmatpush1.bf16.msra.mxu0 0
  %101 = vmatprep.subr.bf16.mxu0 0
  %102 = vmatpush1.bf16.msra.mxu0 0
  %103 = vmatprep.subr.bf16.mxu0 0
  %104 = vmatpush1.bf16.msra.mxu0 0
  %105 = vmatprep.subr.bf16.mxu0 0
  %106 = vmatpush1.bf16.msra.mxu0 0
  %107 = vmatprep.subr.bf16.mxu0 0
  %108 = vmatpush1.bf16.msra.mxu0 0
  %109 = vmatprep.subr.bf16.mxu0 0
  %110 = vmatpush1.bf16.msra.mxu0 0
  %111 = vmatprep.subr.bf16.mxu0 0
  %112 = vmatpush1.bf16.msra.mxu0 0
  %113 = vmatprep.subr.bf16.mxu0 0
  %114 = vmatpush1.bf16.msra.mxu0 0
  %115 = vmatprep.subr.bf16.mxu0 0
  %116 = vmatpush1.bf16.msra.mxu0 0
  %117 = vmatprep.subr.bf16.mxu0 0
  %118 = vmatpush1.bf16.msra.mxu0 0
  %119 = vmatprep.subr.bf16.mxu0 0
  %120 = vmatpush1.bf16.msra.mxu0 0
  %121 = vmatprep.subr.bf16.mxu0 0
  %122 = vmatpush1.bf16.msra.mxu0 0
  %123 = vmatprep.mubr.bf16.mxu0 0
  %124 = vmatmul.mubr.bf16.gmra.mrb[0].mxu0 %v64
  %v125 = vpop.f32.mrb[0].mxu0
  %v126 = vadd.f32 %v60, %v125
  %v127 = vpop.f32.mrb[0].mxu0
  %v128 = vpop.f32.mrb[0].mxu0
  %v129 = vadd.f32 %v60, %v128
  %v130 = vpop.f32.mrb[0].mxu0
  %131 = vmatprep.mubr.bf16.mxu0 0
  %132 = vmatmul.mubr.bf16.gmra.mrb[0].mxu0 %v67
  %v133 = vpop.f32.mrb[0].mxu0
  %v134 = vadd.f32 %v60, %v133
  %v135 = vpop.f32.mrb[0].mxu0
  %v136 = vpop.f32.mrb[0].mxu0
  %v137 = vadd.f32 %v60, %v136
  %v138 = vpop.f32.mrb[0].mxu0
  %139 = vmatprep.mubr.bf16.mxu0 0
  %140 = vmatmul.mubr.bf16.gmra.mrb[0].mxu0 %v70
  %v141 = vpop.f32.mrb[0].mxu0
  %v142 = vadd.f32 %v60, %v141
  %v143 = vpop.f32.mrb[0].mxu0
  %v144 = vpop.f32.mrb[0].mxu0
  %v145 = vadd.f32 %v60, %v144
  %v146 = vpop.f32.mrb[0].mxu0
  %147 = vmatprep.mubr.bf16.mxu0 0
  %148 = vmatmul.mubr.bf16.gmra.mrb[0].mxu0 %v73
  %v149 = vpop.f32.mrb[0].mxu0
  %v150 = vadd.f32 %v60, %v149
  %v151 = vpop.f32.mrb[0].mxu0
  %v152 = vpop.f32.mrb[0].mxu0
  %v153 = vadd.f32 %v60, %v152
  %v154 = vpop.f32.mrb[0].mxu0
  %155 = vmatprep.mubr.bf16.mxu0 0
  %156 = vmatmul.mubr.bf16.gmra.mrb[0].mxu0 %v76
  %v157 = vpop.f32.mrb[0].mxu0
  %v158 = vadd.f32 %v60, %v157
  %v159 = vpop.f32.mrb[0].mxu0
  %v160 = vpop.f32.mrb[0].mxu0
  %v161 = vadd.f32 %v60, %v160
  %v162 = vpop.f32.mrb[0].mxu0
  %163 = vmatprep.mubr.bf16.mxu0 0
  %164 = vmatmul.mubr.bf16.gmra.mrb[0].mxu0 %v79
  %v165 = vpop.f32.mrb[0].mxu0
  %v166 = vadd.f32 %v60, %v165
  %v167 = vpop.f32.mrb[0].mxu0
  %v168 = vpop.f32.mrb[0].mxu0
  %v169 = vadd.f32 %v60, %v168
  %v170 = vpop.f32.mrb[0].mxu0
  %171 = vmatprep.mubr.bf16.mxu0 0
  %172 = vmatmul.mubr.bf16.gmra.mrb[0].mxu0 %v82
  %v173 = vpop.f32.mrb[0].mxu0
  %v174 = vadd.f32 %v60, %v173
  %v175 = vpop.f32.mrb[0].mxu0
  %v176 = vpop.f32.mrb[0].mxu0
  %v177 = vadd.f32 %v60, %v176
  %v178 = vpop.f32.mrb[0].mxu0
  %179 = vmatprep.mubr.bf16.mxu0 0
  %180 = vmatmul.mubr.bf16.gmra.mrb[0].mxu0 %v85
  %v181 = vpop.f32.mrb[0].mxu0
  %v182 = vadd.f32 %v60, %v181
  %v183 = vpop.f32.mrb[0].mxu0
  %v184 = vpop.f32.mrb[0].mxu0
  %v185 = vadd.f32 %v60, %v184
  %v186 = vpop.f32.mrb[0].mxu0
  %187 = vdwg.mxu0
  %v188 = vld [vmem:[%s1] sm:$0xff]
  %v189 = vld [vmem:[%s1 + $0x8] sm:$0xff]
  %v190 = vld [vmem:[%s1 + $0x10] sm:$0xff]
  %v191 = vld [vmem:[%s1 + $0x18] sm:$0xff]
  %v192 = vld [vmem:[%s1 + $0x20] sm:$0xff]
  %v193 = vld [vmem:[%s1 + $0x28] sm:$0xff]
  %v194 = vld [vmem:[%s1 + $0x30] sm:$0xff]
  %v195 = vld [vmem:[%s1 + $0x38] sm:$0xff]
  %v196 = vld [vmem:[%s1 + $0x40] sm:$0xff]
  %v197 = vld [vmem:[%s1 + $0x48] sm:$0xff]
  %v198 = vld [vmem:[%s1 + $0x50] sm:$0xff]
  %v199 = vld [vmem:[%s1 + $0x58] sm:$0xff]
  %v200 = vld [vmem:[%s1 + $0x60] sm:$0xff]
  %v201 = vld [vmem:[%s1 + $0x68] sm:$0xff]
  %v202 = vld [vmem:[%s1 + $0x70] sm:$0xff]
  %v203 = vld [vmem:[%s1 + $0x78] sm:$0xff]
  %v204 = vld [vmem:[%s7] sm:$0x7]
  %v205 = vsub.f32 %v188, %v30
  %v206 = vsub.f32 %v189, %v31
  %v207 = vsub.f32 %v190, %v32
  %v208 = vsub.f32 %v191, %v33
  %v209 = vsub.f32 %v192, %v34
  %v210 = vsub.f32 %v193, %v35
  %v211 = vsub.f32 %v194, %v36
  %v212 = vsub.f32 %v195, %v37
  %v213 = vsub.f32 %v196, %v38
  %v214 = vsub.f32 %v197, %v39
  %v215 = vsub.f32 %v198, %v40
  %v216 = vsub.f32 %v199, %v41
  %v217 = vsub.f32 %v200, %v42
  %v218 = vsub.f32 %v201, %v43
  %v219 = vsub.f32 %v202, %v44
  %v220 = vsub.f32 %v203, %v45
  %v221 = vmul.f32 %v30, %v205
  %v222 = vmul.f32 %v31, %v206
  %v223 = vmul.f32 %v32, %v207
  %v224 = vmul.f32 %v33, %v208
  %v225 = vmul.f32 %v34, %v209
  %v226 = vmul.f32 %v35, %v210
  %v227 = vmul.f32 %v36, %v211
  %v228 = vmul.f32 %v37, %v212
  %v229 = vmul.f32 %v38, %v213
  %v230 = vmul.f32 %v39, %v214
  %v231 = vmul.f32 %v40, %v215
  %v232 = vmul.f32 %v41, %v216
  %v233 = vmul.f32 %v42, %v217
  %v234 = vmul.f32 %v43, %v218
  %v235 = vmul.f32 %v44, %v219
  %v236 = vmul.f32 %v45, %v220
  %v237 = vpack.c.bf16 %v222, %v221
  %v238 = vpack.c.bf16 %v224, %v223
  %v239 = vpack.c.bf16 %v226, %v225
  %v240 = vpack.c.bf16 %v228, %v227
  %v241 = vpack.c.bf16 %v230, %v229
  %v242 = vpack.c.bf16 %v232, %v231
  %v243 = vpack.c.bf16 %v234, %v233
  %v244 = vpack.c.bf16 %v236, %v235
  %v245 = vld [vmem:[%s4] sm:$0xf]
  %v246 = vlaneseq
  %v247 = vshrl.u32 %v246, 7
  %v248 = vsub.s32 0, %v247
  %v249 = vrot.slane %v204, %v248
  %v251 = vsel %vm62, %v237, 0
  %v254 = vsel %vm62, %v238, 0
  %v257 = vsel %vm62, %v239, 0
  %v260 = vsel %vm62, %v240, 0
  %v263 = vsel %vm62, %v241, 0
  %v266 = vsel %vm62, %v242, 0
  %v269 = vsel %vm62, %v243, 0
  %v272 = vsel %vm62, %v244, 0
  %v275 = vsel %vm87, %v245, 0
  %277 = vmatprep.subr.bf16.mxu0 0
  %278 = vmatpush1.bf16.msra.mxu0 %v275
  %279 = vmatprep.subr.bf16.mxu0 0
  %280 = vmatpush1.bf16.msra.mxu0 0
  %281 = vmatprep.subr.bf16.mxu0 0
  %282 = vmatpush1.bf16.msra.mxu0 0
  %283 = vmatprep.subr.bf16.mxu0 0
  %284 = vmatpush1.bf16.msra.mxu0 0
  %285 = vmatprep.subr.bf16.mxu0 0
  %286 = vmatpush1.bf16.msra.mxu0 0
  %287 = vmatprep.subr.bf16.mxu0 0
  %288 = vmatpush1.bf16.msra.mxu0 0
  %289 = vmatprep.subr.bf16.mxu0 0
  %290 = vmatpush1.bf16.msra.mxu0 0
  %291 = vmatprep.subr.bf16.mxu0 0
  %292 = vmatpush1.bf16.msra.mxu0 0
  %293 = vmatprep.subr.bf16.mxu0 0
  %294 = vmatpush1.bf16.msra.mxu0 0
  %295 = vmatprep.subr.bf16.mxu0 0
  %296 = vmatpush1.bf16.msra.mxu0 0
  %297 = vmatprep.subr.bf16.mxu0 0
  %298 = vmatpush1.bf16.msra.mxu0 0
  %299 = vmatprep.subr.bf16.mxu0 0
  %300 = vmatpush1.bf16.msra.mxu0 0
  %301 = vmatprep.subr.bf16.mxu0 0
  %302 = vmatpush1.bf16.msra.mxu0 0
  %303 = vmatprep.subr.bf16.mxu0 0
  %304 = vmatpush1.bf16.msra.mxu0 0
  %305 = vmatprep.subr.bf16.mxu0 0
  %306 = vmatpush1.bf16.msra.mxu0 0
  %307 = vmatprep.subr.bf16.mxu0 0
  %308 = vmatpush1.bf16.msra.mxu0 0
  %309 = vmatprep.mubr.bf16.mxu0 0
  %310 = vmatmul.mubr.bf16.gmra.mrb[0].mxu0 %v251
  %v311 = vpop.f32.mrb[0].mxu0
  %v312 = vadd.f32 %v249, %v311
  %v313 = vpop.f32.mrb[0].mxu0
  %v314 = vpop.f32.mrb[0].mxu0
  %v315 = vadd.f32 %v249, %v314
  %v316 = vpop.f32.mrb[0].mxu0
  %317 = vmatprep.mubr.bf16.mxu0 0
  %318 = vmatmul.mubr.bf16.gmra.mrb[0].mxu0 %v254
  %v319 = vpop.f32.mrb[0].mxu0
  %v320 = vadd.f32 %v249, %v319
  %v321 = vpop.f32.mrb[0].mxu0
  %v322 = vpop.f32.mrb[0].mxu0
  %v323 = vadd.f32 %v249, %v322
  %v324 = vpop.f32.mrb[0].mxu0
  %325 = vmatprep.mubr.bf16.mxu0 0
  %326 = vmatmul.mubr.bf16.gmra.mrb[0].mxu0 %v257
  %v327 = vpop.f32.mrb[0].mxu0
  %v328 = vadd.f32 %v249, %v327
  %v329 = vpop.f32.mrb[0].mxu0
  %v330 = vpop.f32.mrb[0].mxu0
  %v331 = vadd.f32 %v249, %v330
  %v332 = vpop.f32.mrb[0].mxu0
  %333 = vmatprep.mubr.bf16.mxu0 0
  %334 = vmatmul.mubr.bf16.gmra.mrb[0].mxu0 %v260
  %v335 = vpop.f32.mrb[0].mxu0
  %v336 = vadd.f32 %v249, %v335
  %v337 = vpop.f32.mrb[0].mxu0
  %v338 = vpop.f32.mrb[0].mxu0
  %v339 = vadd.f32 %v249, %v338
  %v340 = vpop.f32.mrb[0].mxu0
  %341 = vmatprep.mubr.bf16.mxu0 0
  %342 = vmatmul.mubr.bf16.gmra.mrb[0].mxu0 %v263
  %v343 = vpop.f32.mrb[0].mxu0
  %v344 = vadd.f32 %v249, %v343
  %v345 = vpop.f32.mrb[0].mxu0
  %v346 = vpop.f32.mrb[0].mxu0
  %v347 = vadd.f32 %v249, %v346
  %v348 = vpop.f32.mrb[0].mxu0
  %349 = vmatprep.mubr.bf16.mxu0 0
  %350 = vmatmul.mubr.bf16.gmra.mrb[0].mxu0 %v266
  %v351 = vpop.f32.mrb[0].mxu0
  %v352 = vadd.f32 %v249, %v351
  %v353 = vpop.f32.mrb[0].mxu0
  %v354 = vpop.f32.mrb[0].mxu0
  %v355 = vadd.f32 %v249, %v354
  %v356 = vpop.f32.mrb[0].mxu0
  %357 = vmatprep.mubr.bf16.mxu0 0
  %358 = vmatmul.mubr.bf16.gmra.mrb[0].mxu0 %v269
  %v359 = vpop.f32.mrb[0].mxu0
  %v360 = vadd.f32 %v249, %v359
  %v361 = vpop.f32.mrb[0].mxu0
  %v362 = vpop.f32.mrb[0].mxu0
  %v363 = vadd.f32 %v249, %v362
  %v364 = vpop.f32.mrb[0].mxu0
  %365 = vmatprep.mubr.bf16.mxu0 0
  %366 = vmatmul.mubr.bf16.gmra.mrb[0].mxu0 %v272
  %v367 = vpop.f32.mrb[0].mxu0
  %v368 = vadd.f32 %v249, %v367
  %v369 = vpop.f32.mrb[0].mxu0
  %v370 = vpop.f32.mrb[0].mxu0
  %v371 = vadd.f32 %v249, %v370
  %v372 = vpop.f32.mrb[0].mxu0
  %373 = vdwg.mxu0
  %v374 = vsel %vm62, %v312, 0.0
  %v375 = vsel %vm62, %v315, 0.0
  %v376 = vadd.f32 %v374, %v375
  %v377 = vsel %vm62, %v320, 0.0
  %v378 = vadd.f32 %v376, %v377
  %v379 = vsel %vm62, %v323, 0.0
  %v380 = vadd.f32 %v378, %v379
  %v381 = vsel %vm62, %v328, 0.0
  %v382 = vadd.f32 %v380, %v381
  %v383 = vsel %vm62, %v331, 0.0
  %v384 = vadd.f32 %v382, %v383
  %v385 = vsel %vm62, %v336, 0.0
  %v386 = vadd.f32 %v384, %v385
  %v387 = vsel %vm62, %v339, 0.0
  %v388 = vadd.f32 %v386, %v387
  %v389 = vsel %vm62, %v344, 0.0
  %v390 = vadd.f32 %v388, %v389
  %v391 = vsel %vm62, %v347, 0.0
  %v392 = vadd.f32 %v390, %v391
  %v393 = vsel %vm62, %v352, 0.0
  %v394 = vadd.f32 %v392, %v393
  %v395 = vsel %vm62, %v355, 0.0
  %v396 = vadd.f32 %v394, %v395
  %v397 = vsel %vm62, %v360, 0.0
  %v398 = vadd.f32 %v396, %v397
  %v399 = vsel %vm62, %v363, 0.0
  %v400 = vadd.f32 %v398, %v399
  %v401 = vsel %vm62, %v368, 0.0
  %v402 = vadd.f32 %v400, %v401
  %v403 = vsel %vm62, %v371, 0.0
  %v404 = vadd.f32 %v402, %v403
  %v405 = vrot.slane %v404, 4
  %v406 = vadd.f32 %v404, %v405
  %v407 = vrot.slane %v406, 2
  %v408 = vadd.f32 %v406, %v407
  %v409 = vrot.slane %v408, 1
  %v410 = vadd.f32 %v408, %v409
  %v411 = vrcp.pop 128.0
  %v412 = vmul.f32 %v410, %v411
  %v413 = vmul.f32 %v312, %v312
  %v414 = vmul.f32 %v315, %v315
  %v415 = vmul.f32 %v320, %v320
  %v416 = vmul.f32 %v323, %v323
  %v417 = vmul.f32 %v328, %v328
  %v418 = vmul.f32 %v331, %v331
  %v419 = vmul.f32 %v336, %v336
  %v420 = vmul.f32 %v339, %v339
  %v421 = vmul.f32 %v344, %v344
  %v422 = vmul.f32 %v347, %v347
  %v423 = vmul.f32 %v352, %v352
  %v424 = vmul.f32 %v355, %v355
  %v425 = vmul.f32 %v360, %v360
  %v426 = vmul.f32 %v363, %v363
  %v427 = vmul.f32 %v368, %v368
  %v428 = vmul.f32 %v371, %v371
  %v429 = vsel %vm62, %v413, 0.0
  %v430 = vsel %vm62, %v414, 0.0
  %v431 = vadd.f32 %v429, %v430
  %v432 = vsel %vm62, %v415, 0.0
  %v433 = vadd.f32 %v431, %v432
  %v434 = vsel %vm62, %v416, 0.0
  %v435 = vadd.f32 %v433, %v434
  %v436 = vsel %vm62, %v417, 0.0
  %v437 = vadd.f32 %v435, %v436
  %v438 = vsel %vm62, %v418, 0.0
  %v439 = vadd.f32 %v437, %v438
  %v440 = vsel %vm62, %v419, 0.0
  %v441 = vadd.f32 %v439, %v440
  %v442 = vsel %vm62, %v420, 0.0
  %v443 = vadd.f32 %v441, %v442
  %v444 = vsel %vm62, %v421, 0.0
  %v445 = vadd.f32 %v443, %v444
  %v446 = vsel %vm62, %v422, 0.0
  %v447 = vadd.f32 %v445, %v446
  %v448 = vsel %vm62, %v423, 0.0
  %v449 = vadd.f32 %v447, %v448
  %v450 = vsel %vm62, %v424, 0.0
  %v451 = vadd.f32 %v449, %v450
  %v452 = vsel %vm62, %v425, 0.0
  %v453 = vadd.f32 %v451, %v452
  %v454 = vsel %vm62, %v426, 0.0
  %v455 = vadd.f32 %v453, %v454
  %v456 = vsel %vm62, %v427, 0.0
  %v457 = vadd.f32 %v455, %v456
  %v458 = vsel %vm62, %v428, 0.0
  %v459 = vadd.f32 %v457, %v458
  %v460 = vrot.slane %v459, 4
  %v461 = vadd.f32 %v459, %v460
  %v462 = vrot.slane %v461, 2
  %v463 = vadd.f32 %v461, %v462
  %v464 = vrot.slane %v463, 1
  %v465 = vadd.f32 %v463, %v464
  %v466 = vmul.f32 %v465, %v411
  %v467 = vmul.f32 %v412, %v412
  %v468 = vsub.f32 %v466, %v467
  %v469 = vsub.f32 %v312, %v412
  %v470 = vsub.f32 %v315, %v412
  %v471 = vsub.f32 %v320, %v412
  %v472 = vsub.f32 %v323, %v412
  %v473 = vsub.f32 %v328, %v412
  %v474 = vsub.f32 %v331, %v412
  %v475 = vsub.f32 %v336, %v412
  %v476 = vsub.f32 %v339, %v412
  %v477 = vsub.f32 %v344, %v412
  %v478 = vsub.f32 %v347, %v412
  %v479 = vsub.f32 %v352, %v412
  %v480 = vsub.f32 %v355, %v412
  %v481 = vsub.f32 %v360, %v412
  %v482 = vsub.f32 %v363, %v412
  %v483 = vsub.f32 %v368, %v412
  %v484 = vsub.f32 %v371, %v412
  %v485 = vadd.f32 %v468, 1e-05
  %v486 = vrsqrt.pop %v485
  %v487 = vmul.f32 %v469, %v486
  %v488 = vmul.f32 %v470, %v486
  %v489 = vmul.f32 %v471, %v486
  %v490 = vmul.f32 %v472, %v486
  %v491 = vmul.f32 %v473, %v486
  %v492 = vmul.f32 %v474, %v486
  %v493 = vmul.f32 %v475, %v486
  %v494 = vmul.f32 %v476, %v486
  %v495 = vmul.f32 %v477, %v486
  %v496 = vmul.f32 %v478, %v486
  %v497 = vmul.f32 %v479, %v486
  %v498 = vmul.f32 %v480, %v486
  %v499 = vmul.f32 %v481, %v486
  %v500 = vmul.f32 %v482, %v486
  %v501 = vmul.f32 %v483, %v486
  %v502 = vmul.f32 %v484, %v486
  %v503 = vlaneseq
  %v504 = vshrl.u32 %v503, 7
  %v505 = vsub.s32 1, %v504
  %v506 = vrot.slane %v204, %v505
  %v507 = vmul.f32 %v487, %v506
  %v508 = vmul.f32 %v488, %v506
  %v509 = vmul.f32 %v489, %v506
  %v510 = vmul.f32 %v490, %v506
  %v511 = vmul.f32 %v491, %v506
  %v512 = vmul.f32 %v492, %v506
  %v513 = vmul.f32 %v493, %v506
  %v514 = vmul.f32 %v494, %v506
  %v515 = vmul.f32 %v495, %v506
  %v516 = vmul.f32 %v496, %v506
  %v517 = vmul.f32 %v497, %v506
  %v518 = vmul.f32 %v498, %v506
  %v519 = vmul.f32 %v499, %v506
  %v520 = vmul.f32 %v500, %v506
  %v521 = vmul.f32 %v501, %v506
  %v522 = vmul.f32 %v502, %v506
  %v523 = vlaneseq
  %v524 = vshrl.u32 %v523, 7
  %v525 = vsub.s32 2, %v524
  %v526 = vrot.slane %v204, %v525
  %v527 = vadd.f32 %v507, %v526
  %v528 = vadd.f32 %v508, %v526
  %v529 = vadd.f32 %v509, %v526
  %v530 = vadd.f32 %v510, %v526
  %v531 = vadd.f32 %v511, %v526
  %v532 = vadd.f32 %v512, %v526
  %v533 = vadd.f32 %v513, %v526
  %v534 = vadd.f32 %v514, %v526
  %v535 = vadd.f32 %v515, %v526
  %v536 = vadd.f32 %v516, %v526
  %v537 = vadd.f32 %v517, %v526
  %v538 = vadd.f32 %v518, %v526
  %v539 = vadd.f32 %v519, %v526
  %v540 = vadd.f32 %v520, %v526
  %v541 = vadd.f32 %v521, %v526
  %v542 = vadd.f32 %v522, %v526
  %v543 = vmax.f32 %v527, 0.0
  %v544 = vmax.f32 %v528, 0.0
  %v545 = vmax.f32 %v529, 0.0
  %v546 = vmax.f32 %v530, 0.0
  %v547 = vmax.f32 %v531, 0.0
  %v548 = vmax.f32 %v532, 0.0
  %v549 = vmax.f32 %v533, 0.0
  %v550 = vmax.f32 %v534, 0.0
  %v551 = vmax.f32 %v535, 0.0
  %v552 = vmax.f32 %v536, 0.0
  %v553 = vmax.f32 %v537, 0.0
  %v554 = vmax.f32 %v538, 0.0
  %v555 = vmax.f32 %v539, 0.0
  %v556 = vmax.f32 %v540, 0.0
  %v557 = vmax.f32 %v541, 0.0
  %v558 = vmax.f32 %v542, 0.0
  %v559 = vpack.c.bf16 %v544, %v543
  %v560 = vpack.c.bf16 %v546, %v545
  %v561 = vpack.c.bf16 %v548, %v547
  %v562 = vpack.c.bf16 %v550, %v549
  %v563 = vpack.c.bf16 %v552, %v551
  %v564 = vpack.c.bf16 %v554, %v553
  %v565 = vpack.c.bf16 %v556, %v555
  %v566 = vpack.c.bf16 %v558, %v557
  %v567 = vld [vmem:[%s3] sm:$0xf]
  %v569 = vsel %vm62, %v559, 0
  %v572 = vsel %vm62, %v560, 0
  %v575 = vsel %vm62, %v561, 0
  %v578 = vsel %vm62, %v562, 0
  %v581 = vsel %vm62, %v563, 0
  %v584 = vsel %vm62, %v564, 0
  %v587 = vsel %vm62, %v565, 0
  %v590 = vsel %vm62, %v566, 0
  %v593 = vsel %vm87, %v567, 0
  %595 = vmatprep.subr.bf16.mxu0 0
  %596 = vmatpush1.bf16.msra.mxu0 %v593
  %597 = vmatprep.subr.bf16.mxu0 0
  %598 = vmatpush1.bf16.msra.mxu0 0
  %599 = vmatprep.subr.bf16.mxu0 0
  %600 = vmatpush1.bf16.msra.mxu0 0
  %601 = vmatprep.subr.bf16.mxu0 0
  %602 = vmatpush1.bf16.msra.mxu0 0
  %603 = vmatprep.subr.bf16.mxu0 0
  %604 = vmatpush1.bf16.msra.mxu0 0
  %605 = vmatprep.subr.bf16.mxu0 0
  %606 = vmatpush1.bf16.msra.mxu0 0
  %607 = vmatprep.subr.bf16.mxu0 0
  %608 = vmatpush1.bf16.msra.mxu0 0
  %609 = vmatprep.subr.bf16.mxu0 0
  %610 = vmatpush1.bf16.msra.mxu0 0
  %611 = vmatprep.subr.bf16.mxu0 0
  %612 = vmatpush1.bf16.msra.mxu0 0
  %613 = vmatprep.subr.bf16.mxu0 0
  %614 = vmatpush1.bf16.msra.mxu0 0
  %615 = vmatprep.subr.bf16.mxu0 0
  %616 = vmatpush1.bf16.msra.mxu0 0
  %617 = vmatprep.subr.bf16.mxu0 0
  %618 = vmatpush1.bf16.msra.mxu0 0
  %619 = vmatprep.subr.bf16.mxu0 0
  %620 = vmatpush1.bf16.msra.mxu0 0
  %621 = vmatprep.subr.bf16.mxu0 0
  %622 = vmatpush1.bf16.msra.mxu0 0
  %623 = vmatprep.subr.bf16.mxu0 0
  %624 = vmatpush1.bf16.msra.mxu0 0
  %625 = vmatprep.subr.bf16.mxu0 0
  %626 = vmatpush1.bf16.msra.mxu0 0
  %627 = vmatprep.mubr.bf16.mxu0 0
  %628 = vmatmul.mubr.bf16.gmra.mrb[0].mxu0 %v569
  %v629 = vpop.f32.mrb[0].mxu0
  %v630 = vadd.f32 0.0, %v629
  %v631 = vpop.f32.mrb[0].mxu0
  %v632 = vpop.f32.mrb[0].mxu0
  %v633 = vadd.f32 0.0, %v632
  %v634 = vpop.f32.mrb[0].mxu0
  %635 = vmatprep.mubr.bf16.mxu0 0
  %636 = vmatmul.mubr.bf16.gmra.mrb[0].mxu0 %v572
  %v637 = vpop.f32.mrb[0].mxu0
  %v638 = vadd.f32 0.0, %v637
  %v639 = vpop.f32.mrb[0].mxu0
  %v640 = vpop.f32.mrb[0].mxu0
  %v641 = vadd.f32 0.0, %v640
  %v642 = vpop.f32.mrb[0].mxu0
  %643 = vmatprep.mubr.bf16.mxu0 0
  %644 = vmatmul.mubr.bf16.gmra.mrb[0].mxu0 %v575
  %v645 = vpop.f32.mrb[0].mxu0
  %v646 = vadd.f32 0.0, %v645
  %v647 = vpop.f32.mrb[0].mxu0
  %v648 = vpop.f32.mrb[0].mxu0
  %v649 = vadd.f32 0.0, %v648
  %v650 = vpop.f32.mrb[0].mxu0
  %651 = vmatprep.mubr.bf16.mxu0 0
  %652 = vmatmul.mubr.bf16.gmra.mrb[0].mxu0 %v578
  %v653 = vpop.f32.mrb[0].mxu0
  %v654 = vadd.f32 0.0, %v653
  %v655 = vpop.f32.mrb[0].mxu0
  %v656 = vpop.f32.mrb[0].mxu0
  %v657 = vadd.f32 0.0, %v656
  %v658 = vpop.f32.mrb[0].mxu0
  %659 = vmatprep.mubr.bf16.mxu0 0
  %660 = vmatmul.mubr.bf16.gmra.mrb[0].mxu0 %v581
  %v661 = vpop.f32.mrb[0].mxu0
  %v662 = vadd.f32 0.0, %v661
  %v663 = vpop.f32.mrb[0].mxu0
  %v664 = vpop.f32.mrb[0].mxu0
  %v665 = vadd.f32 0.0, %v664
  %v666 = vpop.f32.mrb[0].mxu0
  %667 = vmatprep.mubr.bf16.mxu0 0
  %668 = vmatmul.mubr.bf16.gmra.mrb[0].mxu0 %v584
  %v669 = vpop.f32.mrb[0].mxu0
  %v670 = vadd.f32 0.0, %v669
  %v671 = vpop.f32.mrb[0].mxu0
  %v672 = vpop.f32.mrb[0].mxu0
  %v673 = vadd.f32 0.0, %v672
  %v674 = vpop.f32.mrb[0].mxu0
  %675 = vmatprep.mubr.bf16.mxu0 0
  %676 = vmatmul.mubr.bf16.gmra.mrb[0].mxu0 %v587
  %v677 = vpop.f32.mrb[0].mxu0
  %v678 = vadd.f32 0.0, %v677
  %v679 = vpop.f32.mrb[0].mxu0
  %v680 = vpop.f32.mrb[0].mxu0
  %v681 = vadd.f32 0.0, %v680
  %v682 = vpop.f32.mrb[0].mxu0
  %683 = vmatprep.mubr.bf16.mxu0 0
  %684 = vmatmul.mubr.bf16.gmra.mrb[0].mxu0 %v590
  %v685 = vpop.f32.mrb[0].mxu0
  %v686 = vadd.f32 0.0, %v685
  %v687 = vpop.f32.mrb[0].mxu0
  %v688 = vpop.f32.mrb[0].mxu0
  %v689 = vadd.f32 0.0, %v688
  %v690 = vpop.f32.mrb[0].mxu0
  %691 = vdwg.mxu0
  %692 = vrot.lane.b32.xlu0 %v60, 112
  %v693 = vpop.permute.xlu0 %692
  %v695 = vadd.f32 %v630, %v693
  %v696 = vadd.f32 %v633, %v693
  %v697 = vadd.f32 %v638, %v693
  %v698 = vadd.f32 %v641, %v693
  %v699 = vadd.f32 %v646, %v693
  %v700 = vadd.f32 %v649, %v693
  %v701 = vadd.f32 %v654, %v693
  %v702 = vadd.f32 %v657, %v693
  %v703 = vadd.f32 %v662, %v693
  %v704 = vadd.f32 %v665, %v693
  %v705 = vadd.f32 %v670, %v693
  %v706 = vadd.f32 %v673, %v693
  %v707 = vadd.f32 %v678, %v693
  %v708 = vadd.f32 %v681, %v693
  %v709 = vadd.f32 %v686, %v693
  %v710 = vadd.f32 %v689, %v693
  %v711 = vpack.c.bf16 %v129, %v126
  %v712 = vpack.c.bf16 %v137, %v134
  %v713 = vpack.c.bf16 %v145, %v142
  %v714 = vpack.c.bf16 %v153, %v150
  %v715 = vpack.c.bf16 %v161, %v158
  %v716 = vpack.c.bf16 %v169, %v166
  %v717 = vpack.c.bf16 %v177, %v174
  %v718 = vpack.c.bf16 %v185, %v182
  %727 = vrot.lane.b32.xlu0 %v711, 120
  %v728 = vpop.permute.xlu0 %727
  %729 = vrot.lane.b32.xlu0 %v712, 120
  %v730 = vpop.permute.xlu0 %729
  %731 = vrot.lane.b32.xlu0 %v713, 120
  %v732 = vpop.permute.xlu0 %731
  %733 = vrot.lane.b32.xlu0 %v714, 120
  %v734 = vpop.permute.xlu0 %733
  %735 = vrot.lane.b32.xlu0 %v715, 120
  %v736 = vpop.permute.xlu0 %735
  %737 = vrot.lane.b32.xlu0 %v716, 120
  %v738 = vpop.permute.xlu0 %737
  %739 = vrot.lane.b32.xlu0 %v717, 120
  %v740 = vpop.permute.xlu0 %739
  %741 = vrot.lane.b32.xlu0 %v718, 120
  %v742 = vpop.permute.xlu0 %741
  %v743 = vpack.c.bf16 %v696, %v695
  %v744 = vpack.c.bf16 %v698, %v697
  %v745 = vpack.c.bf16 %v700, %v699
  %v746 = vpack.c.bf16 %v702, %v701
  %v747 = vpack.c.bf16 %v704, %v703
  %v748 = vpack.c.bf16 %v706, %v705
  %v749 = vpack.c.bf16 %v708, %v707
  %v750 = vpack.c.bf16 %v710, %v709
  %759 = vrot.lane.b32.xlu0 %v743, 120
  %v760 = vpop.permute.xlu0 %759
  %761 = vrot.lane.b32.xlu0 %v744, 120
  %v762 = vpop.permute.xlu0 %761
  %763 = vrot.lane.b32.xlu0 %v745, 120
  %v764 = vpop.permute.xlu0 %763
  %765 = vrot.lane.b32.xlu0 %v746, 120
  %v766 = vpop.permute.xlu0 %765
  %767 = vrot.lane.b32.xlu0 %v747, 120
  %v768 = vpop.permute.xlu0 %767
  %769 = vrot.lane.b32.xlu0 %v748, 120
  %v770 = vpop.permute.xlu0 %769
  %771 = vrot.lane.b32.xlu0 %v749, 120
  %v772 = vpop.permute.xlu0 %771
  %773 = vrot.lane.b32.xlu0 %v750, 120
  %v774 = vpop.permute.xlu0 %773
  %v776 = vsel %vm62, %v711, 0
  %v779 = vsel %vm62, %v712, 0
  %v782 = vsel %vm62, %v713, 0
  %v785 = vsel %vm62, %v714, 0
  %v788 = vsel %vm62, %v743, 0
  %v791 = vsel %vm62, %v744, 0
  %v794 = vsel %vm62, %v745, 0
  %v797 = vsel %vm62, %v746, 0
  %799 = vmatprep.subr.bf16.mxu0 0
  %800 = vmatpush1.bf16.xpose.msra.mxu0 %v788
  %801 = vmatprep.subr.bf16.mxu0 0
  %802 = vmatpush1.bf16.xpose.msra.mxu0 %v791
  %803 = vmatprep.subr.bf16.mxu0 0
  %804 = vmatpush1.bf16.xpose.msra.mxu0 %v794
  %805 = vmatprep.subr.bf16.mxu0 0
  %806 = vmatpush1.bf16.xpose.msra.mxu0 %v797
  %807 = vmatprep.subr.bf16.mxu0 0
  %808 = vmatpush1.bf16.xpose.msra.mxu0 0
  %809 = vmatprep.subr.bf16.mxu0 0
  %810 = vmatpush1.bf16.xpose.msra.mxu0 0
  %811 = vmatprep.subr.bf16.mxu0 0
  %812 = vmatpush1.bf16.xpose.msra.mxu0 0
  %813 = vmatprep.subr.bf16.mxu0 0
  %814 = vmatpush1.bf16.xpose.msra.mxu0 0
  %815 = vmatprep.subr.bf16.mxu0 0
  %816 = vmatpush1.bf16.xpose.msra.mxu0 0
  %817 = vmatprep.subr.bf16.mxu0 0
  %818 = vmatpush1.bf16.xpose.msra.mxu0 0
  %819 = vmatprep.subr.bf16.mxu0 0
  %820 = vmatpush1.bf16.xpose.msra.mxu0 0
  %821 = vmatprep.subr.bf16.mxu0 0
  %822 = vmatpush1.bf16.xpose.msra.mxu0 0
  %823 = vmatprep.subr.bf16.mxu0 0
  %824 = vmatpush1.bf16.xpose.msra.mxu0 0
  %825 = vmatprep.subr.bf16.mxu0 0
  %826 = vmatpush1.bf16.xpose.msra.mxu0 0
  %827 = vmatprep.subr.bf16.mxu0 0
  %828 = vmatpush1.bf16.xpose.msra.mxu0 0
  %829 = vmatprep.subr.bf16.mxu0 0
  %830 = vmatpush1.bf16.xpose.msra.mxu0 0
  %831 = vmatprep.mubr.bf16.mxu0 0
  %832 = vmatmul.mubr.bf16.gmra.mrb[0].mxu0 %v776
  %v833 = vpop.f32.mrb[0].mxu0
  %v834 = vadd.f32 0.0, %v833
  %v835 = vpop.f32.mrb[0].mxu0
  %v836 = vpop.f32.mrb[0].mxu0
  %v837 = vadd.f32 0.0, %v836
  %v838 = vpop.f32.mrb[0].mxu0
  %839 = vmatprep.mubr.bf16.mxu0 0
  %840 = vmatmul.mubr.bf16.gmra.mrb[0].mxu0 %v779
  %v841 = vpop.f32.mrb[0].mxu0
  %v842 = vadd.f32 0.0, %v841
  %v843 = vpop.f32.mrb[0].mxu0
  %v844 = vpop.f32.mrb[0].mxu0
  %v845 = vadd.f32 0.0, %v844
  %v846 = vpop.f32.mrb[0].mxu0
  %847 = vmatprep.mubr.bf16.mxu0 0
  %848 = vmatmul.mubr.bf16.gmra.mrb[0].mxu0 %v782
  %v849 = vpop.f32.mrb[0].mxu0
  %v850 = vadd.f32 0.0, %v849
  %v851 = vpop.f32.mrb[0].mxu0
  %v852 = vpop.f32.mrb[0].mxu0
  %v853 = vadd.f32 0.0, %v852
  %v854 = vpop.f32.mrb[0].mxu0
  %855 = vmatprep.mubr.bf16.mxu0 0
  %856 = vmatmul.mubr.bf16.gmra.mrb[0].mxu0 %v785
  %v857 = vpop.f32.mrb[0].mxu0
  %v858 = vadd.f32 0.0, %v857
  %v859 = vpop.f32.mrb[0].mxu0
  %v860 = vpop.f32.mrb[0].mxu0
  %v861 = vadd.f32 0.0, %v860
  %v862 = vpop.f32.mrb[0].mxu0
  %863 = vdwg.mxu0
  %v865 = vsel %vm62, %v715, 0
  %v868 = vsel %vm62, %v716, 0
  %v871 = vsel %vm62, %v717, 0
  %v874 = vsel %vm62, %v718, 0
  %v877 = vsel %vm62, %v747, 0
  %v880 = vsel %vm62, %v748, 0
  %v883 = vsel %vm62, %v749, 0
  %v886 = vsel %vm62, %v750, 0
  %888 = vmatprep.subr.bf16.mxu0 0
  %889 = vmatpush1.bf16.xpose.msra.mxu0 %v877
  %890 = vmatprep.subr.bf16.mxu0 0
  %891 = vmatpush1.bf16.xpose.msra.mxu0 %v880
  %892 = vmatprep.subr.bf16.mxu0 0
  %893 = vmatpush1.bf16.xpose.msra.mxu0 %v883
  %894 = vmatprep.subr.bf16.mxu0 0
  %895 = vmatpush1.bf16.xpose.msra.mxu0 %v886
  %896 = vmatprep.subr.bf16.mxu0 0
  %897 = vmatpush1.bf16.xpose.msra.mxu0 0
  %898 = vmatprep.subr.bf16.mxu0 0
  %899 = vmatpush1.bf16.xpose.msra.mxu0 0
  %900 = vmatprep.subr.bf16.mxu0 0
  %901 = vmatpush1.bf16.xpose.msra.mxu0 0
  %902 = vmatprep.subr.bf16.mxu0 0
  %903 = vmatpush1.bf16.xpose.msra.mxu0 0
  %904 = vmatprep.subr.bf16.mxu0 0
  %905 = vmatpush1.bf16.xpose.msra.mxu0 0
  %906 = vmatprep.subr.bf16.mxu0 0
  %907 = vmatpush1.bf16.xpose.msra.mxu0 0
  %908 = vmatprep.subr.bf16.mxu0 0
  %909 = vmatpush1.bf16.xpose.msra.mxu0 0
  %910 = vmatprep.subr.bf16.mxu0 0
  %911 = vmatpush1.bf16.xpose.msra.mxu0 0
  %912 = vmatprep.subr.bf16.mxu0 0
  %913 = vmatpush1.bf16.xpose.msra.mxu0 0
  %914 = vmatprep.subr.bf16.mxu0 0
  %915 = vmatpush1.bf16.xpose.msra.mxu0 0
  %916 = vmatprep.subr.bf16.mxu0 0
  %917 = vmatpush1.bf16.xpose.msra.mxu0 0
  %918 = vmatprep.subr.bf16.mxu0 0
  %919 = vmatpush1.bf16.xpose.msra.mxu0 0
  %920 = vmatprep.mubr.bf16.mxu0 0
  %921 = vmatmul.mubr.bf16.gmra.mrb[0].mxu0 %v865
  %v922 = vpop.f32.mrb[0].mxu0
  %v923 = vadd.f32 0.0, %v922
  %v924 = vpop.f32.mrb[0].mxu0
  %v925 = vpop.f32.mrb[0].mxu0
  %v926 = vadd.f32 0.0, %v925
  %v927 = vpop.f32.mrb[0].mxu0
  %928 = vmatprep.mubr.bf16.mxu0 0
  %929 = vmatmul.mubr.bf16.gmra.mrb[0].mxu0 %v868
  %v930 = vpop.f32.mrb[0].mxu0
  %v931 = vadd.f32 0.0, %v930
  %v932 = vpop.f32.mrb[0].mxu0
  %v933 = vpop.f32.mrb[0].mxu0
  %v934 = vadd.f32 0.0, %v933
  %v935 = vpop.f32.mrb[0].mxu0
  %936 = vmatprep.mubr.bf16.mxu0 0
  %937 = vmatmul.mubr.bf16.gmra.mrb[0].mxu0 %v871
  %v938 = vpop.f32.mrb[0].mxu0
  %v939 = vadd.f32 0.0, %v938
  %v940 = vpop.f32.mrb[0].mxu0
  %v941 = vpop.f32.mrb[0].mxu0
  %v942 = vadd.f32 0.0, %v941
  %v943 = vpop.f32.mrb[0].mxu0
  %944 = vmatprep.mubr.bf16.mxu0 0
  %945 = vmatmul.mubr.bf16.gmra.mrb[0].mxu0 %v874
  %v946 = vpop.f32.mrb[0].mxu0
  %v947 = vadd.f32 0.0, %v946
  %v948 = vpop.f32.mrb[0].mxu0
  %v949 = vpop.f32.mrb[0].mxu0
  %v950 = vadd.f32 0.0, %v949
  %v951 = vpop.f32.mrb[0].mxu0
  %952 = vdwg.mxu0
  %v954 = vsel %vm62, %v728, 0
  %v957 = vsel %vm62, %v730, 0
  %v960 = vsel %vm62, %v732, 0
  %v963 = vsel %vm62, %v734, 0
  %v966 = vsel %vm62, %v760, 0
  %v969 = vsel %vm62, %v762, 0
  %v972 = vsel %vm62, %v764, 0
  %v975 = vsel %vm62, %v766, 0
  %977 = vmatprep.subr.bf16.mxu0 0
  %978 = vmatpush1.bf16.xpose.msra.mxu0 %v966
  %979 = vmatprep.subr.bf16.mxu0 0
  %980 = vmatpush1.bf16.xpose.msra.mxu0 %v969
  %981 = vmatprep.subr.bf16.mxu0 0
  %982 = vmatpush1.bf16.xpose.msra.mxu0 %v972
  %983 = vmatprep.subr.bf16.mxu0 0
  %984 = vmatpush1.bf16.xpose.msra.mxu0 %v975
  %985 = vmatprep.subr.bf16.mxu0 0
  %986 = vmatpush1.bf16.xpose.msra.mxu0 0
  %987 = vmatprep.subr.bf16.mxu0 0
  %988 = vmatpush1.bf16.xpose.msra.mxu0 0
  %989 = vmatprep.subr.bf16.mxu0 0
  %990 = vmatpush1.bf16.xpose.msra.mxu0 0
  %991 = vmatprep.subr.bf16.mxu0 0
  %992 = vmatpush1.bf16.xpose.msra.mxu0 0
  %993 = vmatprep.subr.bf16.mxu0 0
  %994 = vmatpush1.bf16.xpose.msra.mxu0 0
  %995 = vmatprep.subr.bf16.mxu0 0
  %996 = vmatpush1.bf16.xpose.msra.mxu0 0
  %997 = vmatprep.subr.bf16.mxu0 0
  %998 = vmatpush1.bf16.xpose.msra.mxu0 0
  %999 = vmatprep.subr.bf16.mxu0 0
  %1000 = vmatpush1.bf16.xpose.msra.mxu0 0
  %1001 = vmatprep.subr.bf16.mxu0 0
  %1002 = vmatpush1.bf16.xpose.msra.mxu0 0
  %1003 = vmatprep.subr.bf16.mxu0 0
  %1004 = vmatpush1.bf16.xpose.msra.mxu0 0
  %1005 = vmatprep.subr.bf16.mxu0 0
  %1006 = vmatpush1.bf16.xpose.msra.mxu0 0
  %1007 = vmatprep.subr.bf16.mxu0 0
  %1008 = vmatpush1.bf16.xpose.msra.mxu0 0
  %1009 = vmatprep.mubr.bf16.mxu0 0
  %1010 = vmatmul.mubr.bf16.gmra.mrb[0].mxu0 %v954
  %v1011 = vpop.f32.mrb[0].mxu0
  %v1012 = vadd.f32 0.0, %v1011
  %v1013 = vpop.f32.mrb[0].mxu0
  %v1014 = vpop.f32.mrb[0].mxu0
  %v1015 = vadd.f32 0.0, %v1014
  %v1016 = vpop.f32.mrb[0].mxu0
  %1017 = vmatprep.mubr.bf16.mxu0 0
  %1018 = vmatmul.mubr.bf16.gmra.mrb[0].mxu0 %v957
  %v1019 = vpop.f32.mrb[0].mxu0
  %v1020 = vadd.f32 0.0, %v1019
  %v1021 = vpop.f32.mrb[0].mxu0
  %v1022 = vpop.f32.mrb[0].mxu0
  %v1023 = vadd.f32 0.0, %v1022
  %v1024 = vpop.f32.mrb[0].mxu0
  %1025 = vmatprep.mubr.bf16.mxu0 0
  %1026 = vmatmul.mubr.bf16.gmra.mrb[0].mxu0 %v960
  %v1027 = vpop.f32.mrb[0].mxu0
  %v1028 = vadd.f32 0.0, %v1027
  %v1029 = vpop.f32.mrb[0].mxu0
  %v1030 = vpop.f32.mrb[0].mxu0
  %v1031 = vadd.f32 0.0, %v1030
  %v1032 = vpop.f32.mrb[0].mxu0
  %1033 = vmatprep.mubr.bf16.mxu0 0
  %1034 = vmatmul.mubr.bf16.gmra.mrb[0].mxu0 %v963
  %v1035 = vpop.f32.mrb[0].mxu0
  %v1036 = vadd.f32 0.0, %v1035
  %v1037 = vpop.f32.mrb[0].mxu0
  %v1038 = vpop.f32.mrb[0].mxu0
  %v1039 = vadd.f32 0.0, %v1038
  %v1040 = vpop.f32.mrb[0].mxu0
  %1041 = vdwg.mxu0
  %v1043 = vsel %vm62, %v736, 0
  %v1046 = vsel %vm62, %v738, 0
  %v1049 = vsel %vm62, %v740, 0
  %v1052 = vsel %vm62, %v742, 0
  %v1055 = vsel %vm62, %v768, 0
  %v1058 = vsel %vm62, %v770, 0
  %v1061 = vsel %vm62, %v772, 0
  %v1064 = vsel %vm62, %v774, 0
  %1066 = vmatprep.subr.bf16.mxu0 0
  %1067 = vmatpush1.bf16.xpose.msra.mxu0 %v1055
  %1068 = vmatprep.subr.bf16.mxu0 0
  %1069 = vmatpush1.bf16.xpose.msra.mxu0 %v1058
  %1070 = vmatprep.subr.bf16.mxu0 0
  %1071 = vmatpush1.bf16.xpose.msra.mxu0 %v1061
  %1072 = vmatprep.subr.bf16.mxu0 0
  %1073 = vmatpush1.bf16.xpose.msra.mxu0 %v1064
  %1074 = vmatprep.subr.bf16.mxu0 0
  %1075 = vmatpush1.bf16.xpose.msra.mxu0 0
  %1076 = vmatprep.subr.bf16.mxu0 0
  %1077 = vmatpush1.bf16.xpose.msra.mxu0 0
  %1078 = vmatprep.subr.bf16.mxu0 0
  %1079 = vmatpush1.bf16.xpose.msra.mxu0 0
  %1080 = vmatprep.subr.bf16.mxu0 0
  %1081 = vmatpush1.bf16.xpose.msra.mxu0 0
  %1082 = vmatprep.subr.bf16.mxu0 0
  %1083 = vmatpush1.bf16.xpose.msra.mxu0 0
  %1084 = vmatprep.subr.bf16.mxu0 0
  %1085 = vmatpush1.bf16.xpose.msra.mxu0 0
  %1086 = vmatprep.subr.bf16.mxu0 0
  %1087 = vmatpush1.bf16.xpose.msra.mxu0 0
  %1088 = vmatprep.subr.bf16.mxu0 0
  %1089 = vmatpush1.bf16.xpose.msra.mxu0 0
  %1090 = vmatprep.subr.bf16.mxu0 0
  %1091 = vmatpush1.bf16.xpose.msra.mxu0 0
  %1092 = vmatprep.subr.bf16.mxu0 0
  %1093 = vmatpush1.bf16.xpose.msra.mxu0 0
  %1094 = vmatprep.subr.bf16.mxu0 0
  %1095 = vmatpush1.bf16.xpose.msra.mxu0 0
  %1096 = vmatprep.subr.bf16.mxu0 0
  %1097 = vmatpush1.bf16.xpose.msra.mxu0 0
  %1098 = vmatprep.mubr.bf16.mxu0 0
  %1099 = vmatmul.mubr.bf16.gmra.mrb[0].mxu0 %v1043
  %v1100 = vpop.f32.mrb[0].mxu0
  %v1101 = vadd.f32 0.0, %v1100
  %v1102 = vpop.f32.mrb[0].mxu0
  %v1103 = vpop.f32.mrb[0].mxu0
  %v1104 = vadd.f32 0.0, %v1103
  %v1105 = vpop.f32.mrb[0].mxu0
  %1106 = vmatprep.mubr.bf16.mxu0 0
  %1107 = vmatmul.mubr.bf16.gmra.mrb[0].mxu0 %v1046
  %v1108 = vpop.f32.mrb[0].mxu0
  %v1109 = vadd.f32 0.0, %v1108
  %v1110 = vpop.f32.mrb[0].mxu0
  %v1111 = vpop.f32.mrb[0].mxu0
  %v1112 = vadd.f32 0.0, %v1111
  %v1113 = vpop.f32.mrb[0].mxu0
  %1114 = vmatprep.mubr.bf16.mxu0 0
  %1115 = vmatmul.mubr.bf16.gmra.mrb[0].mxu0 %v1049
  %v1116 = vpop.f32.mrb[0].mxu0
  %v1117 = vadd.f32 0.0, %v1116
  %v1118 = vpop.f32.mrb[0].mxu0
  %v1119 = vpop.f32.mrb[0].mxu0
  %v1120 = vadd.f32 0.0, %v1119
  %v1121 = vpop.f32.mrb[0].mxu0
  %1122 = vmatprep.mubr.bf16.mxu0 0
  %1123 = vmatmul.mubr.bf16.gmra.mrb[0].mxu0 %v1052
  %v1124 = vpop.f32.mrb[0].mxu0
  %v1125 = vadd.f32 0.0, %v1124
  %v1126 = vpop.f32.mrb[0].mxu0
  %v1127 = vpop.f32.mrb[0].mxu0
  %v1128 = vadd.f32 0.0, %v1127
  %v1129 = vpop.f32.mrb[0].mxu0
  %1130 = vdwg.mxu0
  %vm1131 = vcmask 523264
  %v1132 = vsel %vm1131, %v834, -inf
  %1133 = vmax.xlane.f32.xlu0 %v1132
  %v1134 = vpop.xlane.xlu0 %1133
  %v1135 = vsel %vm1131, %v837, -inf
  %1136 = vmax.xlane.f32.xlu0 %v1135
  %v1137 = vpop.xlane.xlu0 %1136
  %v1138 = vsel %vm1131, %v842, -inf
  %1139 = vmax.xlane.f32.xlu0 %v1138
  %v1140 = vpop.xlane.xlu0 %1139
  %v1141 = vsel %vm1131, %v845, -inf
  %1142 = vmax.xlane.f32.xlu0 %v1141
  %v1143 = vpop.xlane.xlu0 %1142
  %v1144 = vsel %vm1131, %v850, -inf
  %1145 = vmax.xlane.f32.xlu0 %v1144
  %v1146 = vpop.xlane.xlu0 %1145
  %v1147 = vsel %vm1131, %v853, -inf
  %1148 = vmax.xlane.f32.xlu0 %v1147
  %v1149 = vpop.xlane.xlu0 %1148
  %v1150 = vsel %vm1131, %v858, -inf
  %1151 = vmax.xlane.f32.xlu0 %v1150
  %v1152 = vpop.xlane.xlu0 %1151
  %v1153 = vsel %vm1131, %v861, -inf
  %1154 = vmax.xlane.f32.xlu0 %v1153
  %v1155 = vpop.xlane.xlu0 %1154
  %v1156 = vsel %vm1131, %v923, -inf
  %1157 = vmax.xlane.f32.xlu0 %v1156
  %v1158 = vpop.xlane.xlu0 %1157
  %v1159 = vsel %vm1131, %v926, -inf
  %1160 = vmax.xlane.f32.xlu0 %v1159
  %v1161 = vpop.xlane.xlu0 %1160
  %v1162 = vsel %vm1131, %v931, -inf
  %1163 = vmax.xlane.f32.xlu0 %v1162
  %v1164 = vpop.xlane.xlu0 %1163
  %v1165 = vsel %vm1131, %v934, -inf
  %1166 = vmax.xlane.f32.xlu0 %v1165
  %v1167 = vpop.xlane.xlu0 %1166
  %v1168 = vsel %vm1131, %v939, -inf
  %1169 = vmax.xlane.f32.xlu0 %v1168
  %v1170 = vpop.xlane.xlu0 %1169
  %v1171 = vsel %vm1131, %v942, -inf
  %1172 = vmax.xlane.f32.xlu0 %v1171
  %v1173 = vpop.xlane.xlu0 %1172
  %v1174 = vsel %vm1131, %v947, -inf
  %1175 = vmax.xlane.f32.xlu0 %v1174
  %v1176 = vpop.xlane.xlu0 %1175
  %v1177 = vsel %vm1131, %v950, -inf
  %1178 = vmax.xlane.f32.xlu0 %v1177
  %v1179 = vpop.xlane.xlu0 %1178
  %v1180 = vsel %vm1131, %v1012, -inf
  %1181 = vmax.xlane.f32.xlu0 %v1180
  %v1182 = vpop.xlane.xlu0 %1181
  %v1183 = vsel %vm1131, %v1015, -inf
  %1184 = vmax.xlane.f32.xlu0 %v1183
  %v1185 = vpop.xlane.xlu0 %1184
  %v1186 = vsel %vm1131, %v1020, -inf
  %1187 = vmax.xlane.f32.xlu0 %v1186
  %v1188 = vpop.xlane.xlu0 %1187
  %v1189 = vsel %vm1131, %v1023, -inf
  %1190 = vmax.xlane.f32.xlu0 %v1189
  %v1191 = vpop.xlane.xlu0 %1190
  %v1192 = vsel %vm1131, %v1028, -inf
  %1193 = vmax.xlane.f32.xlu0 %v1192
  %v1194 = vpop.xlane.xlu0 %1193
  %v1195 = vsel %vm1131, %v1031, -inf
  %1196 = vmax.xlane.f32.xlu0 %v1195
  %v1197 = vpop.xlane.xlu0 %1196
  %v1198 = vsel %vm1131, %v1036, -inf
  %1199 = vmax.xlane.f32.xlu0 %v1198
  %v1200 = vpop.xlane.xlu0 %1199
  %v1201 = vsel %vm1131, %v1039, -inf
  %1202 = vmax.xlane.f32.xlu0 %v1201
  %v1203 = vpop.xlane.xlu0 %1202
  %v1204 = vsel %vm1131, %v1101, -inf
  %1205 = vmax.xlane.f32.xlu0 %v1204
  %v1206 = vpop.xlane.xlu0 %1205
  %v1207 = vsel %vm1131, %v1104, -inf
  %1208 = vmax.xlane.f32.xlu0 %v1207
  %v1209 = vpop.xlane.xlu0 %1208
  %v1210 = vsel %vm1131, %v1109, -inf
  %1211 = vmax.xlane.f32.xlu0 %v1210
  %v1212 = vpop.xlane.xlu0 %1211
  %v1213 = vsel %vm1131, %v1112, -inf
  %1214 = vmax.xlane.f32.xlu0 %v1213
  %v1215 = vpop.xlane.xlu0 %1214
  %v1216 = vsel %vm1131, %v1117, -inf
  %1217 = vmax.xlane.f32.xlu0 %v1216
  %v1218 = vpop.xlane.xlu0 %1217
  %v1219 = vsel %vm1131, %v1120, -inf
  %1220 = vmax.xlane.f32.xlu0 %v1219
  %v1221 = vpop.xlane.xlu0 %1220
  %v1222 = vsel %vm1131, %v1125, -inf
  %1223 = vmax.xlane.f32.xlu0 %v1222
  %v1224 = vpop.xlane.xlu0 %1223
  %v1225 = vsel %vm1131, %v1128, -inf
  %1226 = vmax.xlane.f32.xlu0 %v1225
  %v1227 = vpop.xlane.xlu0 %1226
  %v1228 = vsub.f32 %v834, %v1134
  %v1229 = vsub.f32 %v837, %v1137
  %v1230 = vsub.f32 %v842, %v1140
  %v1231 = vsub.f32 %v845, %v1143
  %v1232 = vsub.f32 %v850, %v1146
  %v1233 = vsub.f32 %v853, %v1149
  %v1234 = vsub.f32 %v858, %v1152
  %v1235 = vsub.f32 %v861, %v1155
  %v1236 = vsub.f32 %v923, %v1158
  %v1237 = vsub.f32 %v926, %v1161
  %v1238 = vsub.f32 %v931, %v1164
  %v1239 = vsub.f32 %v934, %v1167
  %v1240 = vsub.f32 %v939, %v1170
  %v1241 = vsub.f32 %v942, %v1173
  %v1242 = vsub.f32 %v947, %v1176
  %v1243 = vsub.f32 %v950, %v1179
  %v1244 = vsub.f32 %v1012, %v1182
  %v1245 = vsub.f32 %v1015, %v1185
  %v1246 = vsub.f32 %v1020, %v1188
  %v1247 = vsub.f32 %v1023, %v1191
  %v1248 = vsub.f32 %v1028, %v1194
  %v1249 = vsub.f32 %v1031, %v1197
  %v1250 = vsub.f32 %v1036, %v1200
  %v1251 = vsub.f32 %v1039, %v1203
  %v1252 = vsub.f32 %v1101, %v1206
  %v1253 = vsub.f32 %v1104, %v1209
  %v1254 = vsub.f32 %v1109, %v1212
  %v1255 = vsub.f32 %v1112, %v1215
  %v1256 = vsub.f32 %v1117, %v1218
  %v1257 = vsub.f32 %v1120, %v1221
  %v1258 = vsub.f32 %v1125, %v1224
  %v1259 = vsub.f32 %v1128, %v1227
  %v1260 = vmul.f32 %v1228, 1.442695
  %v1261 = vpow.pop %v1260
  %v1262 = vmul.f32 %v1229, 1.442695
  %v1263 = vpow.pop %v1262
  %v1264 = vmul.f32 %v1230, 1.442695
  %v1265 = vpow.pop %v1264
  %v1266 = vmul.f32 %v1231, 1.442695
  %v1267 = vpow.pop %v1266
  %v1268 = vmul.f32 %v1232, 1.442695
  %v1269 = vpow.pop %v1268
  %v1270 = vmul.f32 %v1233, 1.442695
  %v1271 = vpow.pop %v1270
  %v1272 = vmul.f32 %v1234, 1.442695
  %v1273 = vpow.pop %v1272
  %v1274 = vmul.f32 %v1235, 1.442695
  %v1275 = vpow.pop %v1274
  %v1276 = vmul.f32 %v1236, 1.442695
  %v1277 = vpow.pop %v1276
  %v1278 = vmul.f32 %v1237, 1.442695
  %v1279 = vpow.pop %v1278
  %v1280 = vmul.f32 %v1238, 1.442695
  %v1281 = vpow.pop %v1280
  %v1282 = vmul.f32 %v1239, 1.442695
  %v1283 = vpow.pop %v1282
  %v1284 = vmul.f32 %v1240, 1.442695
  %v1285 = vpow.pop %v1284
  %v1286 = vmul.f32 %v1241, 1.442695
  %v1287 = vpow.pop %v1286
  %v1288 = vmul.f32 %v1242, 1.442695
  %v1289 = vpow.pop %v1288
  %v1290 = vmul.f32 %v1243, 1.442695
  %v1291 = vpow.pop %v1290
  %v1292 = vmul.f32 %v1244, 1.442695
  %v1293 = vpow.pop %v1292
  %v1294 = vmul.f32 %v1245, 1.442695
  %v1295 = vpow.pop %v1294
  %v1296 = vmul.f32 %v1246, 1.442695
  %v1297 = vpow.pop %v1296
  %v1298 = vmul.f32 %v1247, 1.442695
  %v1299 = vpow.pop %v1298
  %v1300 = vmul.f32 %v1248, 1.442695
  %v1301 = vpow.pop %v1300
  %v1302 = vmul.f32 %v1249, 1.442695
  %v1303 = vpow.pop %v1302
  %v1304 = vmul.f32 %v1250, 1.442695
  %v1305 = vpow.pop %v1304
  %v1306 = vmul.f32 %v1251, 1.442695
  %v1307 = vpow.pop %v1306
  %v1308 = vmul.f32 %v1252, 1.442695
  %v1309 = vpow.pop %v1308
  %v1310 = vmul.f32 %v1253, 1.442695
  %v1311 = vpow.pop %v1310
  %v1312 = vmul.f32 %v1254, 1.442695
  %v1313 = vpow.pop %v1312
  %v1314 = vmul.f32 %v1255, 1.442695
  %v1315 = vpow.pop %v1314
  %v1316 = vmul.f32 %v1256, 1.442695
  %v1317 = vpow.pop %v1316
  %v1318 = vmul.f32 %v1257, 1.442695
  %v1319 = vpow.pop %v1318
  %v1320 = vmul.f32 %v1258, 1.442695
  %v1321 = vpow.pop %v1320
  %v1322 = vmul.f32 %v1259, 1.442695
  %v1323 = vpow.pop %v1322
  %v1324 = vsel %vm1131, %v1261, 0.0
  %1325 = vadd.xlane.f32.xlu0 %v1324
  %v1326 = vpop.xlane.xlu0 %1325
  %v1327 = vsel %vm1131, %v1263, 0.0
  %1328 = vadd.xlane.f32.xlu0 %v1327
  %v1329 = vpop.xlane.xlu0 %1328
  %v1330 = vsel %vm1131, %v1265, 0.0
  %1331 = vadd.xlane.f32.xlu0 %v1330
  %v1332 = vpop.xlane.xlu0 %1331
  %v1333 = vsel %vm1131, %v1267, 0.0
  %1334 = vadd.xlane.f32.xlu0 %v1333
  %v1335 = vpop.xlane.xlu0 %1334
  %v1336 = vsel %vm1131, %v1269, 0.0
  %1337 = vadd.xlane.f32.xlu0 %v1336
  %v1338 = vpop.xlane.xlu0 %1337
  %v1339 = vsel %vm1131, %v1271, 0.0
  %1340 = vadd.xlane.f32.xlu0 %v1339
  %v1341 = vpop.xlane.xlu0 %1340
  %v1342 = vsel %vm1131, %v1273, 0.0
  %1343 = vadd.xlane.f32.xlu0 %v1342
  %v1344 = vpop.xlane.xlu0 %1343
  %v1345 = vsel %vm1131, %v1275, 0.0
  %1346 = vadd.xlane.f32.xlu0 %v1345
  %v1347 = vpop.xlane.xlu0 %1346
  %v1348 = vsel %vm1131, %v1277, 0.0
  %1349 = vadd.xlane.f32.xlu0 %v1348
  %v1350 = vpop.xlane.xlu0 %1349
  %v1351 = vsel %vm1131, %v1279, 0.0
  %1352 = vadd.xlane.f32.xlu0 %v1351
  %v1353 = vpop.xlane.xlu0 %1352
  %v1354 = vsel %vm1131, %v1281, 0.0
  %1355 = vadd.xlane.f32.xlu0 %v1354
  %v1356 = vpop.xlane.xlu0 %1355
  %v1357 = vsel %vm1131, %v1283, 0.0
  %1358 = vadd.xlane.f32.xlu0 %v1357
  %v1359 = vpop.xlane.xlu0 %1358
  %v1360 = vsel %vm1131, %v1285, 0.0
  %1361 = vadd.xlane.f32.xlu0 %v1360
  %v1362 = vpop.xlane.xlu0 %1361
  %v1363 = vsel %vm1131, %v1287, 0.0
  %1364 = vadd.xlane.f32.xlu0 %v1363
  %v1365 = vpop.xlane.xlu0 %1364
  %v1366 = vsel %vm1131, %v1289, 0.0
  %1367 = vadd.xlane.f32.xlu0 %v1366
  %v1368 = vpop.xlane.xlu0 %1367
  %v1369 = vsel %vm1131, %v1291, 0.0
  %1370 = vadd.xlane.f32.xlu0 %v1369
  %v1371 = vpop.xlane.xlu0 %1370
  %v1372 = vsel %vm1131, %v1293, 0.0
  %1373 = vadd.xlane.f32.xlu0 %v1372
  %v1374 = vpop.xlane.xlu0 %1373
  %v1375 = vsel %vm1131, %v1295, 0.0
  %1376 = vadd.xlane.f32.xlu0 %v1375
  %v1377 = vpop.xlane.xlu0 %1376
  %v1378 = vsel %vm1131, %v1297, 0.0
  %1379 = vadd.xlane.f32.xlu0 %v1378
  %v1380 = vpop.xlane.xlu0 %1379
  %v1381 = vsel %vm1131, %v1299, 0.0
  %1382 = vadd.xlane.f32.xlu0 %v1381
  %v1383 = vpop.xlane.xlu0 %1382
  %v1384 = vsel %vm1131, %v1301, 0.0
  %1385 = vadd.xlane.f32.xlu0 %v1384
  %v1386 = vpop.xlane.xlu0 %1385
  %v1387 = vsel %vm1131, %v1303, 0.0
  %1388 = vadd.xlane.f32.xlu0 %v1387
  %v1389 = vpop.xlane.xlu0 %1388
  %v1390 = vsel %vm1131, %v1305, 0.0
  %1391 = vadd.xlane.f32.xlu0 %v1390
  %v1392 = vpop.xlane.xlu0 %1391
  %v1393 = vsel %vm1131, %v1307, 0.0
  %1394 = vadd.xlane.f32.xlu0 %v1393
  %v1395 = vpop.xlane.xlu0 %1394
  %v1396 = vsel %vm1131, %v1309, 0.0
  %1397 = vadd.xlane.f32.xlu0 %v1396
  %v1398 = vpop.xlane.xlu0 %1397
  %v1399 = vsel %vm1131, %v1311, 0.0
  %1400 = vadd.xlane.f32.xlu0 %v1399
  %v1401 = vpop.xlane.xlu0 %1400
  %v1402 = vsel %vm1131, %v1313, 0.0
  %1403 = vadd.xlane.f32.xlu0 %v1402
  %v1404 = vpop.xlane.xlu0 %1403
  %v1405 = vsel %vm1131, %v1315, 0.0
  %1406 = vadd.xlane.f32.xlu0 %v1405
  %v1407 = vpop.xlane.xlu0 %1406
  %v1408 = vsel %vm1131, %v1317, 0.0
  %1409 = vadd.xlane.f32.xlu0 %v1408
  %v1410 = vpop.xlane.xlu0 %1409
  %v1411 = vsel %vm1131, %v1319, 0.0
  %1412 = vadd.xlane.f32.xlu0 %v1411
  %v1413 = vpop.xlane.xlu0 %1412
  %v1414 = vsel %vm1131, %v1321, 0.0
  %1415 = vadd.xlane.f32.xlu0 %v1414
  %v1416 = vpop.xlane.xlu0 %1415
  %v1417 = vsel %vm1131, %v1323, 0.0
  %1418 = vadd.xlane.f32.xlu0 %v1417
  %v1419 = vpop.xlane.xlu0 %1418
  %v1420 = vpack.c.bf16 %v1263, %v1261
  %v1421 = vpack.c.bf16 %v1267, %v1265
  %v1422 = vpack.c.bf16 %v1271, %v1269
  %v1423 = vpack.c.bf16 %v1275, %v1273
  %v1424 = vpack.c.bf16 %v1279, %v1277
  %v1425 = vpack.c.bf16 %v1283, %v1281
  %v1426 = vpack.c.bf16 %v1287, %v1285
  %v1427 = vpack.c.bf16 %v1291, %v1289
  %v1428 = vpack.c.bf16 %v1295, %v1293
  %v1429 = vpack.c.bf16 %v1299, %v1297
  %v1430 = vpack.c.bf16 %v1303, %v1301
  %v1431 = vpack.c.bf16 %v1307, %v1305
  %v1432 = vpack.c.bf16 %v1311, %v1309
  %v1433 = vpack.c.bf16 %v1315, %v1313
  %v1434 = vpack.c.bf16 %v1319, %v1317
  %v1435 = vpack.c.bf16 %v1323, %v1321
  %1436 = vrot.lane.b32.xlu0 %v743, 112
  %v1437 = vpop.permute.xlu0 %1436
  %1438 = vrot.lane.b32.xlu0 %v744, 112
  %v1439 = vpop.permute.xlu0 %1438
  %1440 = vrot.lane.b32.xlu0 %v745, 112
  %v1441 = vpop.permute.xlu0 %1440
  %1442 = vrot.lane.b32.xlu0 %v746, 112
  %v1443 = vpop.permute.xlu0 %1442
  %v1449 = vsel %vm1131, %v1420, 0
  %v1452 = vsel %vm1131, %v1421, 0
  %v1455 = vsel %vm1131, %v1422, 0
  %v1458 = vsel %vm1131, %v1423, 0
  %1460 = vmatprep.subr.bf16.mxu0 0
  %1461 = vmatpush1.bf16.msra.mxu0 %v1437
  %1462 = vmatprep.subr.bf16.mxu0 0
  %1463 = vmatpush1.bf16.msra.mxu0 %v1439
  %1464 = vmatprep.subr.bf16.mxu0 0
  %1465 = vmatpush1.bf16.msra.mxu0 %v1441
  %1466 = vmatprep.subr.bf16.mxu0 0
  %1467 = vmatpush1.bf16.msra.mxu0 %v1443
  %1468 = vmatprep.subr.bf16.mxu0 0
  %1469 = vmatpush1.bf16.msra.mxu0 0
  %1470 = vmatprep.subr.bf16.mxu0 0
  %1471 = vmatpush1.bf16.msra.mxu0 0
  %1472 = vmatprep.subr.bf16.mxu0 0
  %1473 = vmatpush1.bf16.msra.mxu0 0
  %1474 = vmatprep.subr.bf16.mxu0 0
  %1475 = vmatpush1.bf16.msra.mxu0 0
  %1476 = vmatprep.subr.bf16.mxu0 0
  %1477 = vmatpush1.bf16.msra.mxu0 0
  %1478 = vmatprep.subr.bf16.mxu0 0
  %1479 = vmatpush1.bf16.msra.mxu0 0
  %1480 = vmatprep.subr.bf16.mxu0 0
  %1481 = vmatpush1.bf16.msra.mxu0 0
  %1482 = vmatprep.subr.bf16.mxu0 0
  %1483 = vmatpush1.bf16.msra.mxu0 0
  %1484 = vmatprep.subr.bf16.mxu0 0
  %1485 = vmatpush1.bf16.msra.mxu0 0
  %1486 = vmatprep.subr.bf16.mxu0 0
  %1487 = vmatpush1.bf16.msra.mxu0 0
  %1488 = vmatprep.subr.bf16.mxu0 0
  %1489 = vmatpush1.bf16.msra.mxu0 0
  %1490 = vmatprep.subr.bf16.mxu0 0
  %1491 = vmatpush1.bf16.msra.mxu0 0
  %1492 = vmatprep.mubr.bf16.mxu0 0
  %1493 = vmatmul.mubr.bf16.gmra.mrb[0].mxu0 %v1449
  %v1494 = vpop.f32.mrb[0].mxu0
  %v1495 = vadd.f32 0.0, %v1494
  %v1496 = vpop.f32.mrb[0].mxu0
  %v1497 = vpop.f32.mrb[0].mxu0
  %v1498 = vadd.f32 0.0, %v1497
  %v1499 = vpop.f32.mrb[0].mxu0
  %1500 = vmatprep.mubr.bf16.mxu0 0
  %1501 = vmatmul.mubr.bf16.gmra.mrb[0].mxu0 %v1452
  %v1502 = vpop.f32.mrb[0].mxu0
  %v1503 = vadd.f32 0.0, %v1502
  %v1504 = vpop.f32.mrb[0].mxu0
  %v1505 = vpop.f32.mrb[0].mxu0
  %v1506 = vadd.f32 0.0, %v1505
  %v1507 = vpop.f32.mrb[0].mxu0
  %1508 = vmatprep.mubr.bf16.mxu0 0
  %1509 = vmatmul.mubr.bf16.gmra.mrb[0].mxu0 %v1455
  %v1510 = vpop.f32.mrb[0].mxu0
  %v1511 = vadd.f32 0.0, %v1510
  %v1512 = vpop.f32.mrb[0].mxu0
  %v1513 = vpop.f32.mrb[0].mxu0
  %v1514 = vadd.f32 0.0, %v1513
  %v1515 = vpop.f32.mrb[0].mxu0
  %1516 = vmatprep.mubr.bf16.mxu0 0
  %1517 = vmatmul.mubr.bf16.gmra.mrb[0].mxu0 %v1458
  %v1518 = vpop.f32.mrb[0].mxu0
  %v1519 = vadd.f32 0.0, %v1518
  %v1520 = vpop.f32.mrb[0].mxu0
  %v1521 = vpop.f32.mrb[0].mxu0
  %v1522 = vadd.f32 0.0, %v1521
  %v1523 = vpop.f32.mrb[0].mxu0
  %1524 = vdwg.mxu0
  %1525 = vrot.lane.b32.xlu0 %v747, 112
  %v1526 = vpop.permute.xlu0 %1525
  %1527 = vrot.lane.b32.xlu0 %v748, 112
  %v1528 = vpop.permute.xlu0 %1527
  %1529 = vrot.lane.b32.xlu0 %v749, 112
  %v1530 = vpop.permute.xlu0 %1529
  %1531 = vrot.lane.b32.xlu0 %v750, 112
  %v1532 = vpop.permute.xlu0 %1531
  %v1538 = vsel %vm1131, %v1424, 0
  %v1541 = vsel %vm1131, %v1425, 0
  %v1544 = vsel %vm1131, %v1426, 0
  %v1547 = vsel %vm1131, %v1427, 0
  %1549 = vmatprep.subr.bf16.mxu0 0
  %1550 = vmatpush1.bf16.msra.mxu0 %v1526
  %1551 = vmatprep.subr.bf16.mxu0 0
  %1552 = vmatpush1.bf16.msra.mxu0 %v1528
  %1553 = vmatprep.subr.bf16.mxu0 0
  %1554 = vmatpush1.bf16.msra.mxu0 %v1530
  %1555 = vmatprep.subr.bf16.mxu0 0
  %1556 = vmatpush1.bf16.msra.mxu0 %v1532
  %1557 = vmatprep.subr.bf16.mxu0 0
  %1558 = vmatpush1.bf16.msra.mxu0 0
  %1559 = vmatprep.subr.bf16.mxu0 0
  %1560 = vmatpush1.bf16.msra.mxu0 0
  %1561 = vmatprep.subr.bf16.mxu0 0
  %1562 = vmatpush1.bf16.msra.mxu0 0
  %1563 = vmatprep.subr.bf16.mxu0 0
  %1564 = vmatpush1.bf16.msra.mxu0 0
  %1565 = vmatprep.subr.bf16.mxu0 0
  %1566 = vmatpush1.bf16.msra.mxu0 0
  %1567 = vmatprep.subr.bf16.mxu0 0
  %1568 = vmatpush1.bf16.msra.mxu0 0
  %1569 = vmatprep.subr.bf16.mxu0 0
  %1570 = vmatpush1.bf16.msra.mxu0 0
  %1571 = vmatprep.subr.bf16.mxu0 0
  %1572 = vmatpush1.bf16.msra.mxu0 0
  %1573 = vmatprep.subr.bf16.mxu0 0
  %1574 = vmatpush1.bf16.msra.mxu0 0
  %1575 = vmatprep.subr.bf16.mxu0 0
  %1576 = vmatpush1.bf16.msra.mxu0 0
  %1577 = vmatprep.subr.bf16.mxu0 0
  %1578 = vmatpush1.bf16.msra.mxu0 0
  %1579 = vmatprep.subr.bf16.mxu0 0
  %1580 = vmatpush1.bf16.msra.mxu0 0
  %1581 = vmatprep.mubr.bf16.mxu0 0
  %1582 = vmatmul.mubr.bf16.gmra.mrb[0].mxu0 %v1538
  %v1583 = vpop.f32.mrb[0].mxu0
  %v1584 = vadd.f32 0.0, %v1583
  %v1585 = vpop.f32.mrb[0].mxu0
  %v1586 = vpop.f32.mrb[0].mxu0
  %v1587 = vadd.f32 0.0, %v1586
  %v1588 = vpop.f32.mrb[0].mxu0
  %1589 = vmatprep.mubr.bf16.mxu0 0
  %1590 = vmatmul.mubr.bf16.gmra.mrb[0].mxu0 %v1541
  %v1591 = vpop.f32.mrb[0].mxu0
  %v1592 = vadd.f32 0.0, %v1591
  %v1593 = vpop.f32.mrb[0].mxu0
  %v1594 = vpop.f32.mrb[0].mxu0
  %v1595 = vadd.f32 0.0, %v1594
  %v1596 = vpop.f32.mrb[0].mxu0
  %1597 = vmatprep.mubr.bf16.mxu0 0
  %1598 = vmatmul.mubr.bf16.gmra.mrb[0].mxu0 %v1544
  %v1599 = vpop.f32.mrb[0].mxu0
  %v1600 = vadd.f32 0.0, %v1599
  %v1601 = vpop.f32.mrb[0].mxu0
  %v1602 = vpop.f32.mrb[0].mxu0
  %v1603 = vadd.f32 0.0, %v1602
  %v1604 = vpop.f32.mrb[0].mxu0
  %1605 = vmatprep.mubr.bf16.mxu0 0
  %1606 = vmatmul.mubr.bf16.gmra.mrb[0].mxu0 %v1547
  %v1607 = vpop.f32.mrb[0].mxu0
  %v1608 = vadd.f32 0.0, %v1607
  %v1609 = vpop.f32.mrb[0].mxu0
  %v1610 = vpop.f32.mrb[0].mxu0
  %v1611 = vadd.f32 0.0, %v1610
  %v1612 = vpop.f32.mrb[0].mxu0
  %1613 = vdwg.mxu0
  %1614 = vrot.lane.b32.xlu0 %v760, 112
  %v1615 = vpop.permute.xlu0 %1614
  %1616 = vrot.lane.b32.xlu0 %v762, 112
  %v1617 = vpop.permute.xlu0 %1616
  %1618 = vrot.lane.b32.xlu0 %v764, 112
  %v1619 = vpop.permute.xlu0 %1618
  %1620 = vrot.lane.b32.xlu0 %v766, 112
  %v1621 = vpop.permute.xlu0 %1620
  %v1627 = vsel %vm1131, %v1428, 0
  %v1630 = vsel %vm1131, %v1429, 0
  %v1633 = vsel %vm1131, %v1430, 0
  %v1636 = vsel %vm1131, %v1431, 0
  %1638 = vmatprep.subr.bf16.mxu0 0
  %1639 = vmatpush1.bf16.msra.mxu0 %v1615
  %1640 = vmatprep.subr.bf16.mxu0 0
  %1641 = vmatpush1.bf16.msra.mxu0 %v1617
  %1642 = vmatprep.subr.bf16.mxu0 0
  %1643 = vmatpush1.bf16.msra.mxu0 %v1619
  %1644 = vmatprep.subr.bf16.mxu0 0
  %1645 = vmatpush1.bf16.msra.mxu0 %v1621
  %1646 = vmatprep.subr.bf16.mxu0 0
  %1647 = vmatpush1.bf16.msra.mxu0 0
  %1648 = vmatprep.subr.bf16.mxu0 0
  %1649 = vmatpush1.bf16.msra.mxu0 0
  %1650 = vmatprep.subr.bf16.mxu0 0
  %1651 = vmatpush1.bf16.msra.mxu0 0
  %1652 = vmatprep.subr.bf16.mxu0 0
  %1653 = vmatpush1.bf16.msra.mxu0 0
  %1654 = vmatprep.subr.bf16.mxu0 0
  %1655 = vmatpush1.bf16.msra.mxu0 0
  %1656 = vmatprep.subr.bf16.mxu0 0
  %1657 = vmatpush1.bf16.msra.mxu0 0
  %1658 = vmatprep.subr.bf16.mxu0 0
  %1659 = vmatpush1.bf16.msra.mxu0 0
  %1660 = vmatprep.subr.bf16.mxu0 0
  %1661 = vmatpush1.bf16.msra.mxu0 0
  %1662 = vmatprep.subr.bf16.mxu0 0
  %1663 = vmatpush1.bf16.msra.mxu0 0
  %1664 = vmatprep.subr.bf16.mxu0 0
  %1665 = vmatpush1.bf16.msra.mxu0 0
  %1666 = vmatprep.subr.bf16.mxu0 0
  %1667 = vmatpush1.bf16.msra.mxu0 0
  %1668 = vmatprep.subr.bf16.mxu0 0
  %1669 = vmatpush1.bf16.msra.mxu0 0
  %1670 = vmatprep.mubr.bf16.mxu0 0
  %1671 = vmatmul.mubr.bf16.gmra.mrb[0].mxu0 %v1627
  %v1672 = vpop.f32.mrb[0].mxu0
  %v1673 = vadd.f32 0.0, %v1672
  %v1674 = vpop.f32.mrb[0].mxu0
  %v1675 = vpop.f32.mrb[0].mxu0
  %v1676 = vadd.f32 0.0, %v1675
  %v1677 = vpop.f32.mrb[0].mxu0
  %1678 = vmatprep.mubr.bf16.mxu0 0
  %1679 = vmatmul.mubr.bf16.gmra.mrb[0].mxu0 %v1630
  %v1680 = vpop.f32.mrb[0].mxu0
  %v1681 = vadd.f32 0.0, %v1680
  %v1682 = vpop.f32.mrb[0].mxu0
  %v1683 = vpop.f32.mrb[0].mxu0
  %v1684 = vadd.f32 0.0, %v1683
  %v1685 = vpop.f32.mrb[0].mxu0
  %1686 = vmatprep.mubr.bf16.mxu0 0
  %1687 = vmatmul.mubr.bf16.gmra.mrb[0].mxu0 %v1633
  %v1688 = vpop.f32.mrb[0].mxu0
  %v1689 = vadd.f32 0.0, %v1688
  %v1690 = vpop.f32.mrb[0].mxu0
  %v1691 = vpop.f32.mrb[0].mxu0
  %v1692 = vadd.f32 0.0, %v1691
  %v1693 = vpop.f32.mrb[0].mxu0
  %1694 = vmatprep.mubr.bf16.mxu0 0
  %1695 = vmatmul.mubr.bf16.gmra.mrb[0].mxu0 %v1636
  %v1696 = vpop.f32.mrb[0].mxu0
  %v1697 = vadd.f32 0.0, %v1696
  %v1698 = vpop.f32.mrb[0].mxu0
  %v1699 = vpop.f32.mrb[0].mxu0
  %v1700 = vadd.f32 0.0, %v1699
  %v1701 = vpop.f32.mrb[0].mxu0
  %1702 = vdwg.mxu0
  %1703 = vrot.lane.b32.xlu0 %v768, 112
  %v1704 = vpop.permute.xlu0 %1703
  %1705 = vrot.lane.b32.xlu0 %v770, 112
  %v1706 = vpop.permute.xlu0 %1705
  %1707 = vrot.lane.b32.xlu0 %v772, 112
  %v1708 = vpop.permute.xlu0 %1707
  %1709 = vrot.lane.b32.xlu0 %v774, 112
  %v1710 = vpop.permute.xlu0 %1709
  %v1716 = vsel %vm1131, %v1432, 0
  %v1719 = vsel %vm1131, %v1433, 0
  %v1722 = vsel %vm1131, %v1434, 0
  %v1725 = vsel %vm1131, %v1435, 0
  %1727 = vmatprep.subr.bf16.mxu0 0
  %1728 = vmatpush1.bf16.msra.mxu0 %v1704
  %1729 = vmatprep.subr.bf16.mxu0 0
  %1730 = vmatpush1.bf16.msra.mxu0 %v1706
  %1731 = vmatprep.subr.bf16.mxu0 0
  %1732 = vmatpush1.bf16.msra.mxu0 %v1708
  %1733 = vmatprep.subr.bf16.mxu0 0
  %1734 = vmatpush1.bf16.msra.mxu0 %v1710
  %1735 = vmatprep.subr.bf16.mxu0 0
  %1736 = vmatpush1.bf16.msra.mxu0 0
  %1737 = vmatprep.subr.bf16.mxu0 0
  %1738 = vmatpush1.bf16.msra.mxu0 0
  %1739 = vmatprep.subr.bf16.mxu0 0
  %1740 = vmatpush1.bf16.msra.mxu0 0
  %1741 = vmatprep.subr.bf16.mxu0 0
  %1742 = vmatpush1.bf16.msra.mxu0 0
  %1743 = vmatprep.subr.bf16.mxu0 0
  %1744 = vmatpush1.bf16.msra.mxu0 0
  %1745 = vmatprep.subr.bf16.mxu0 0
  %1746 = vmatpush1.bf16.msra.mxu0 0
  %1747 = vmatprep.subr.bf16.mxu0 0
  %1748 = vmatpush1.bf16.msra.mxu0 0
  %1749 = vmatprep.subr.bf16.mxu0 0
  %1750 = vmatpush1.bf16.msra.mxu0 0
  %1751 = vmatprep.subr.bf16.mxu0 0
  %1752 = vmatpush1.bf16.msra.mxu0 0
  %1753 = vmatprep.subr.bf16.mxu0 0
  %1754 = vmatpush1.bf16.msra.mxu0 0
  %1755 = vmatprep.subr.bf16.mxu0 0
  %1756 = vmatpush1.bf16.msra.mxu0 0
  %1757 = vmatprep.subr.bf16.mxu0 0
  %1758 = vmatpush1.bf16.msra.mxu0 0
  %1759 = vmatprep.mubr.bf16.mxu0 0
  %1760 = vmatmul.mubr.bf16.gmra.mrb[0].mxu0 %v1716
  %v1761 = vpop.f32.mrb[0].mxu0
  %v1762 = vadd.f32 0.0, %v1761
  %v1763 = vpop.f32.mrb[0].mxu0
  %v1764 = vpop.f32.mrb[0].mxu0
  %v1765 = vadd.f32 0.0, %v1764
  %v1766 = vpop.f32.mrb[0].mxu0
  %1767 = vmatprep.mubr.bf16.mxu0 0
  %1768 = vmatmul.mubr.bf16.gmra.mrb[0].mxu0 %v1719
  %v1769 = vpop.f32.mrb[0].mxu0
  %v1770 = vadd.f32 0.0, %v1769
  %v1771 = vpop.f32.mrb[0].mxu0
  %v1772 = vpop.f32.mrb[0].mxu0
  %v1773 = vadd.f32 0.0, %v1772
  %v1774 = vpop.f32.mrb[0].mxu0
  %1775 = vmatprep.mubr.bf16.mxu0 0
  %1776 = vmatmul.mubr.bf16.gmra.mrb[0].mxu0 %v1722
  %v1777 = vpop.f32.mrb[0].mxu0
  %v1778 = vadd.f32 0.0, %v1777
  %v1779 = vpop.f32.mrb[0].mxu0
  %v1780 = vpop.f32.mrb[0].mxu0
  %v1781 = vadd.f32 0.0, %v1780
  %v1782 = vpop.f32.mrb[0].mxu0
  %1783 = vmatprep.mubr.bf16.mxu0 0
  %1784 = vmatmul.mubr.bf16.gmra.mrb[0].mxu0 %v1725
  %v1785 = vpop.f32.mrb[0].mxu0
  %v1786 = vadd.f32 0.0, %v1785
  %v1787 = vpop.f32.mrb[0].mxu0
  %v1788 = vpop.f32.mrb[0].mxu0
  %v1789 = vadd.f32 0.0, %v1788
  %v1790 = vpop.f32.mrb[0].mxu0
  %1791 = vdwg.mxu0
  %v1792 = vrcp.pop %v1326
  %v1793 = vrcp.pop %v1329
  %v1794 = vrcp.pop %v1332
  %v1795 = vrcp.pop %v1335
  %v1796 = vrcp.pop %v1338
  %v1797 = vrcp.pop %v1341
  %v1798 = vrcp.pop %v1344
  %v1799 = vrcp.pop %v1347
  %v1800 = vrcp.pop %v1350
  %v1801 = vrcp.pop %v1353
  %v1802 = vrcp.pop %v1356
  %v1803 = vrcp.pop %v1359
  %v1804 = vrcp.pop %v1362
  %v1805 = vrcp.pop %v1365
  %v1806 = vrcp.pop %v1368
  %v1807 = vrcp.pop %v1371
  %v1808 = vrcp.pop %v1374
  %v1809 = vrcp.pop %v1377
  %v1810 = vrcp.pop %v1380
  %v1811 = vrcp.pop %v1383
  %v1812 = vrcp.pop %v1386
  %v1813 = vrcp.pop %v1389
  %v1814 = vrcp.pop %v1392
  %v1815 = vrcp.pop %v1395
  %v1816 = vrcp.pop %v1398
  %v1817 = vrcp.pop %v1401
  %v1818 = vrcp.pop %v1404
  %v1819 = vrcp.pop %v1407
  %v1820 = vrcp.pop %v1410
  %v1821 = vrcp.pop %v1413
  %v1822 = vrcp.pop %v1416
  %v1823 = vrcp.pop %v1419
  %v1824 = vmul.f32 %v1495, %v1792
  %v1825 = vmul.f32 %v1498, %v1793
  %v1826 = vmul.f32 %v1503, %v1794
  %v1827 = vmul.f32 %v1506, %v1795
  %v1828 = vmul.f32 %v1511, %v1796
  %v1829 = vmul.f32 %v1514, %v1797
  %v1830 = vmul.f32 %v1519, %v1798
  %v1831 = vmul.f32 %v1522, %v1799
  %v1832 = vmul.f32 %v1584, %v1800
  %v1833 = vmul.f32 %v1587, %v1801
  %v1834 = vmul.f32 %v1592, %v1802
  %v1835 = vmul.f32 %v1595, %v1803
  %v1836 = vmul.f32 %v1600, %v1804
  %v1837 = vmul.f32 %v1603, %v1805
  %v1838 = vmul.f32 %v1608, %v1806
  %v1839 = vmul.f32 %v1611, %v1807
  %v1840 = vmul.f32 %v1673, %v1808
  %v1841 = vmul.f32 %v1676, %v1809
  %v1842 = vmul.f32 %v1681, %v1810
  %v1843 = vmul.f32 %v1684, %v1811
  %v1844 = vmul.f32 %v1689, %v1812
  %v1845 = vmul.f32 %v1692, %v1813
  %v1846 = vmul.f32 %v1697, %v1814
  %v1847 = vmul.f32 %v1700, %v1815
  %v1848 = vmul.f32 %v1762, %v1816
  %v1849 = vmul.f32 %v1765, %v1817
  %v1850 = vmul.f32 %v1770, %v1818
  %v1851 = vmul.f32 %v1773, %v1819
  %v1852 = vmul.f32 %v1778, %v1820
  %v1853 = vmul.f32 %v1781, %v1821
  %v1854 = vmul.f32 %v1786, %v1822
  %v1855 = vmul.f32 %v1789, %v1823
  %1872 = vrot.lane.b32.xlu0 %v1840, 8
  %v1873 = vpop.permute.xlu0 %1872
  %1874 = vrot.lane.b32.xlu0 %v1841, 8
  %v1875 = vpop.permute.xlu0 %1874
  %1876 = vrot.lane.b32.xlu0 %v1842, 8
  %v1877 = vpop.permute.xlu0 %1876
  %1878 = vrot.lane.b32.xlu0 %v1843, 8
  %v1879 = vpop.permute.xlu0 %1878
  %1880 = vrot.lane.b32.xlu0 %v1844, 8
  %v1881 = vpop.permute.xlu0 %1880
  %1882 = vrot.lane.b32.xlu0 %v1845, 8
  %v1883 = vpop.permute.xlu0 %1882
  %1884 = vrot.lane.b32.xlu0 %v1846, 8
  %v1885 = vpop.permute.xlu0 %1884
  %1886 = vrot.lane.b32.xlu0 %v1847, 8
  %v1887 = vpop.permute.xlu0 %1886
  %1888 = vrot.lane.b32.xlu0 %v1848, 8
  %v1889 = vpop.permute.xlu0 %1888
  %1890 = vrot.lane.b32.xlu0 %v1849, 8
  %v1891 = vpop.permute.xlu0 %1890
  %1892 = vrot.lane.b32.xlu0 %v1850, 8
  %v1893 = vpop.permute.xlu0 %1892
  %1894 = vrot.lane.b32.xlu0 %v1851, 8
  %v1895 = vpop.permute.xlu0 %1894
  %1896 = vrot.lane.b32.xlu0 %v1852, 8
  %v1897 = vpop.permute.xlu0 %1896
  %1898 = vrot.lane.b32.xlu0 %v1853, 8
  %v1899 = vpop.permute.xlu0 %1898
  %1900 = vrot.lane.b32.xlu0 %v1854, 8
  %v1901 = vpop.permute.xlu0 %1900
  %1902 = vrot.lane.b32.xlu0 %v1855, 8
  %v1903 = vpop.permute.xlu0 %1902
  %v1920 = vsel %vm62, %v1824, %v1873
  %v1921 = vsel %vm62, %v1825, %v1875
  %v1922 = vsel %vm62, %v1826, %v1877
  %v1923 = vsel %vm62, %v1827, %v1879
  %v1924 = vsel %vm62, %v1828, %v1881
  %v1925 = vsel %vm62, %v1829, %v1883
  %v1926 = vsel %vm62, %v1830, %v1885
  %v1927 = vsel %vm62, %v1831, %v1887
  %v1928 = vsel %vm62, %v1832, %v1889
  %v1929 = vsel %vm62, %v1833, %v1891
  %v1930 = vsel %vm62, %v1834, %v1893
  %v1931 = vsel %vm62, %v1835, %v1895
  %v1932 = vsel %vm62, %v1836, %v1897
  %v1933 = vsel %vm62, %v1837, %v1899
  %v1934 = vsel %vm62, %v1838, %v1901
  %v1935 = vsel %vm62, %v1839, %v1903
  %v1936 = vpack.c.bf16 %v1921, %v1920
  %v1937 = vpack.c.bf16 %v1923, %v1922
  %v1938 = vpack.c.bf16 %v1925, %v1924
  %v1939 = vpack.c.bf16 %v1927, %v1926
  %v1940 = vpack.c.bf16 %v1929, %v1928
  %v1941 = vpack.c.bf16 %v1931, %v1930
  %v1942 = vpack.c.bf16 %v1933, %v1932
  %v1943 = vpack.c.bf16 %v1935, %v1934
  %v1944 = vld [vmem:[%s5] sm:$0xf]
  %v1945 = vld [vmem:[%s5 + $0x4] sm:$0xf]
  %v1948 = vunpack.c.l.b16 %v1944
  %v1949 = vunpack.c.l.b16 %v1945
  %v1950 = vpack.c.b16 %v1949, %v1948
  %1952 = vrot.lane.b32.xlu0 %v60, 80
  %v1953 = vpop.permute.xlu0 %1952
  %vm1955 = vcmask 130048
  %v1957 = vsel %vm1955, %v1936, 0
  %v1960 = vsel %vm1955, %v1937, 0
  %v1963 = vsel %vm1955, %v1938, 0
  %v1966 = vsel %vm1955, %v1939, 0
  %v1969 = vsel %vm1955, %v1940, 0
  %v1972 = vsel %vm1955, %v1941, 0
  %v1975 = vsel %vm1955, %v1942, 0
  %v1978 = vsel %vm1955, %v1943, 0
  %1980 = vmatprep.subr.bf16.mxu0 0
  %1981 = vmatpush1.bf16.msra.mxu0 %v1950
  %1982 = vmatprep.subr.bf16.mxu0 0
  %1983 = vmatpush1.bf16.msra.mxu0 0
  %1984 = vmatprep.subr.bf16.mxu0 0
  %1985 = vmatpush1.bf16.msra.mxu0 0
  %1986 = vmatprep.subr.bf16.mxu0 0
  %1987 = vmatpush1.bf16.msra.mxu0 0
  %1988 = vmatprep.subr.bf16.mxu0 0
  %1989 = vmatpush1.bf16.msra.mxu0 0
  %1990 = vmatprep.subr.bf16.mxu0 0
  %1991 = vmatpush1.bf16.msra.mxu0 0
  %1992 = vmatprep.subr.bf16.mxu0 0
  %1993 = vmatpush1.bf16.msra.mxu0 0
  %1994 = vmatprep.subr.bf16.mxu0 0
  %1995 = vmatpush1.bf16.msra.mxu0 0
  %1996 = vmatprep.subr.bf16.mxu0 0
  %1997 = vmatpush1.bf16.msra.mxu0 0
  %1998 = vmatprep.subr.bf16.mxu0 0
  %1999 = vmatpush1.bf16.msra.mxu0 0
  %2000 = vmatprep.subr.bf16.mxu0 0
  %2001 = vmatpush1.bf16.msra.mxu0 0
  %2002 = vmatprep.subr.bf16.mxu0 0
  %2003 = vmatpush1.bf16.msra.mxu0 0
  %2004 = vmatprep.subr.bf16.mxu0 0
  %2005 = vmatpush1.bf16.msra.mxu0 0
  %2006 = vmatprep.subr.bf16.mxu0 0
  %2007 = vmatpush1.bf16.msra.mxu0 0
  %2008 = vmatprep.subr.bf16.mxu0 0
  %2009 = vmatpush1.bf16.msra.mxu0 0
  %2010 = vmatprep.subr.bf16.mxu0 0
  %2011 = vmatpush1.bf16.msra.mxu0 0
  %2012 = vmatprep.mubr.bf16.mxu0 0
  %2013 = vmatmul.mubr.bf16.gmra.mrb[0].mxu0 %v1957
  %v2014 = vpop.f32.mrb[0].mxu0
  %v2015 = vadd.f32 %v1953, %v2014
  %v2016 = vpop.f32.mrb[0].mxu0
  %v2017 = vpop.f32.mrb[0].mxu0
  %v2018 = vadd.f32 %v1953, %v2017
  %v2019 = vpop.f32.mrb[0].mxu0
  %2020 = vmatprep.mubr.bf16.mxu0 0
  %2021 = vmatmul.mubr.bf16.gmra.mrb[0].mxu0 %v1960
  %v2022 = vpop.f32.mrb[0].mxu0
  %v2023 = vadd.f32 %v1953, %v2022
  %v2024 = vpop.f32.mrb[0].mxu0
  %v2025 = vpop.f32.mrb[0].mxu0
  %v2026 = vadd.f32 %v1953, %v2025
  %v2027 = vpop.f32.mrb[0].mxu0
  %2028 = vmatprep.mubr.bf16.mxu0 0
  %2029 = vmatmul.mubr.bf16.gmra.mrb[0].mxu0 %v1963
  %v2030 = vpop.f32.mrb[0].mxu0
  %v2031 = vadd.f32 %v1953, %v2030
  %v2032 = vpop.f32.mrb[0].mxu0
  %v2033 = vpop.f32.mrb[0].mxu0
  %v2034 = vadd.f32 %v1953, %v2033
  %v2035 = vpop.f32.mrb[0].mxu0
  %2036 = vmatprep.mubr.bf16.mxu0 0
  %2037 = vmatmul.mubr.bf16.gmra.mrb[0].mxu0 %v1966
  %v2038 = vpop.f32.mrb[0].mxu0
  %v2039 = vadd.f32 %v1953, %v2038
  %v2040 = vpop.f32.mrb[0].mxu0
  %v2041 = vpop.f32.mrb[0].mxu0
  %v2042 = vadd.f32 %v1953, %v2041
  %v2043 = vpop.f32.mrb[0].mxu0
  %2044 = vmatprep.mubr.bf16.mxu0 0
  %2045 = vmatmul.mubr.bf16.gmra.mrb[0].mxu0 %v1969
  %v2046 = vpop.f32.mrb[0].mxu0
  %v2047 = vadd.f32 %v1953, %v2046
  %v2048 = vpop.f32.mrb[0].mxu0
  %v2049 = vpop.f32.mrb[0].mxu0
  %v2050 = vadd.f32 %v1953, %v2049
  %v2051 = vpop.f32.mrb[0].mxu0
  %2052 = vmatprep.mubr.bf16.mxu0 0
  %2053 = vmatmul.mubr.bf16.gmra.mrb[0].mxu0 %v1972
  %v2054 = vpop.f32.mrb[0].mxu0
  %v2055 = vadd.f32 %v1953, %v2054
  %v2056 = vpop.f32.mrb[0].mxu0
  %v2057 = vpop.f32.mrb[0].mxu0
  %v2058 = vadd.f32 %v1953, %v2057
  %v2059 = vpop.f32.mrb[0].mxu0
  %2060 = vmatprep.mubr.bf16.mxu0 0
  %2061 = vmatmul.mubr.bf16.gmra.mrb[0].mxu0 %v1975
  %v2062 = vpop.f32.mrb[0].mxu0
  %v2063 = vadd.f32 %v1953, %v2062
  %v2064 = vpop.f32.mrb[0].mxu0
  %v2065 = vpop.f32.mrb[0].mxu0
  %v2066 = vadd.f32 %v1953, %v2065
  %v2067 = vpop.f32.mrb[0].mxu0
  %2068 = vmatprep.mubr.bf16.mxu0 0
  %2069 = vmatmul.mubr.bf16.gmra.mrb[0].mxu0 %v1978
  %v2070 = vpop.f32.mrb[0].mxu0
  %v2071 = vadd.f32 %v1953, %v2070
  %v2072 = vpop.f32.mrb[0].mxu0
  %v2073 = vpop.f32.mrb[0].mxu0
  %v2074 = vadd.f32 %v1953, %v2073
  %v2075 = vpop.f32.mrb[0].mxu0
  %2076 = vdwg.mxu0
  %2077 = vst.msk [vmem:[%s8] sm:$0xff] %vm62, %v2015
  %2078 = vst.msk [vmem:[%s8 + $0x8] sm:$0xff] %vm62, %v2018
  %2079 = vst.msk [vmem:[%s8 + $0x10] sm:$0xff] %vm62, %v2023
  %2080 = vst.msk [vmem:[%s8 + $0x18] sm:$0xff] %vm62, %v2026
  %2081 = vst.msk [vmem:[%s8 + $0x20] sm:$0xff] %vm62, %v2031
  %2082 = vst.msk [vmem:[%s8 + $0x28] sm:$0xff] %vm62, %v2034
  %2083 = vst.msk [vmem:[%s8 + $0x30] sm:$0xff] %vm62, %v2039
  %2084 = vst.msk [vmem:[%s8 + $0x38] sm:$0xff] %vm62, %v2042
  %2085 = vst.msk [vmem:[%s8 + $0x40] sm:$0xff] %vm62, %v2047
  %2086 = vst.msk [vmem:[%s8 + $0x48] sm:$0xff] %vm62, %v2050
  %2087 = vst.msk [vmem:[%s8 + $0x50] sm:$0xff] %vm62, %v2055
  %2088 = vst.msk [vmem:[%s8 + $0x58] sm:$0xff] %vm62, %v2058
  %2089 = vst.msk [vmem:[%s8 + $0x60] sm:$0xff] %vm62, %v2063
  %2090 = vst.msk [vmem:[%s8 + $0x68] sm:$0xff] %vm62, %v2066
  %2091 = vst.msk [vmem:[%s8 + $0x70] sm:$0xff] %vm62, %v2071
  %2092 = vst.msk [vmem:[%s8 + $0x78] sm:$0xff] %vm62, %v2074
  // Predicated region
  $region34: #{multi_head_att.1} parent=0 // pred_check
    _
  $region35: #{multi_head_att.1} parent=0 // pred_check_branch
    %2094 = sbr.rel (0) target = $region37
  $region36: #{multi_head_att.1} parent=0 // pred_region
    _
  $region37: #{multi_head_att.1} parent=0 // pred_fallthru
    _
  // Predicated region
  $region38: #{multi_head_att.1} parent=0 // pred_check
    _
  $region39: #{multi_head_att.1} parent=0 // pred_check_branch
    %2096 = sbr.rel (0) target = $region41
  $region40: #{multi_head_att.1} parent=0 // pred_region
    _
  $region41: #{multi_head_att.1} parent=0 // pred_fallthru
    _

</llo_original>
